<compile_context>
chip_gen: v5e
topology: v5e:2x2
jax: 0.10.0
libtpu: 0.0.40
codegen_flags: <defaults>
</compile_context>

<pallas_src>
import jax
import jax.numpy as jnp
from jax.experimental import pallas as pl
from jax.experimental.pallas import tpu as pltpu


IN_FEATURES = 28 * 28     # 784 (logical, same as PyTorch); kept unpadded in HBM
HIDDEN = 512
OUT_FEATURES = 10         # logical logits
OUT_PADDED = 128          # lane-dense output block; wrapper slices [:, :10]


def mlp_kernel(x_ref, w1_ref, b1_ref, w2_ref, b2_ref, w3_ref, b3_ref, o_ref):
    """Fused 3-layer MLP on one batch tile; bf16 matmuls, f32 accumulation.

    The f32 -> bf16 cast of the activation stream is fused here (VPU) so the
    wrapper never materializes a padded bf16 copy of x in HBM.
    """
    x = x_ref[...].astype(jnp.bfloat16)  # (tile, 784) f32 tile -> bf16 in VMEM

    h1 = jnp.dot(x, w1_ref[...], preferred_element_type=jnp.float32) + b1_ref[...]
    h1 = jnp.maximum(h1, 0.0).astype(jnp.bfloat16)

    h2 = jnp.dot(h1, w2_ref[...], preferred_element_type=jnp.float32) + b2_ref[...]
    h2 = jnp.maximum(h2, 0.0).astype(jnp.bfloat16)

    logits = jnp.dot(h2, w3_ref[...], preferred_element_type=jnp.float32) + b3_ref[...]
    o_ref[...] = logits.astype(o_ref.dtype)  # lane-dense (tile, 128) f32 store


def _prepare_params(params):
    """Cast / pad logical (PyTorch-layout) params into the kernel layout."""
    w1, b1, w2, b2, w3, b3 = params
    # Weights stored as (in_features, out_features) so the kernel computes x @ W.
    w1p = w1.astype(jnp.bfloat16)                       # (784, 512) - no K padding needed
    w2p = w2.astype(jnp.bfloat16)                       # (512, 512)
    w3p = jnp.zeros((HIDDEN, OUT_PADDED), jnp.bfloat16) # (512, 128), zero-padded lanes
    w3p = w3p.at[:, :OUT_FEATURES].set(w3.astype(jnp.bfloat16))
    b1p = b1.reshape(1, HIDDEN).astype(jnp.float32)
    b2p = b2.reshape(1, HIDDEN).astype(jnp.float32)
    b3p = jnp.zeros((1, OUT_PADDED), jnp.float32)
    b3p = b3p.at[0, :OUT_FEATURES].set(b3.astype(jnp.float32))
    return w1p, b1p, w2p, b2p, w3p, b3p


def _round_up(v, m):
    return ((v + m - 1) // m) * m


def _pick_tile(n, batch_tile):
    """Pick the batch tile: fill the MXU, but keep >= 2 grid steps for v7x."""
    n8 = _round_up(max(n, 1), 8)           # sublane-aligned batch
    tile = min(batch_tile, n8)
    # v7x has 2 TensorCores; dimension_semantics=("parallel",) shards the 1-D
    # batch grid across them, so make sure mid/large batches get >= 2 steps
    # (each step still >= 128 rows so the MXU M dim stays filled).
    if n8 >= 256:
        tile = min(tile, max(128, _round_up((n8 + 1) // 2, 8)))
    tile = max(8, (tile // 8) * 8)
    n_pad = _round_up(n, tile)
    return tile, n_pad


def neural_network_forward(x_nchw, params, *, batch_tile=1024):
    """x_nchw: (N, 1, 28, 28) float32 -> logits (N, 10) float32."""
    N = x_nchw.shape[0]
    # nn.Flatten(): (N, 1, 28, 28) -> (N, 784), row-major, same as PyTorch.
    x = x_nchw.reshape(N, -1).astype(jnp.float32)
    assert x.shape[1] == IN_FEATURES

    tile, n_pad = _pick_tile(N, batch_tile)

    # Only batch padding (single fused pad op); features stay at 784 and the
    # bf16 cast is done inside the kernel.
    xp = x if n_pad == N else jnp.pad(x, ((0, n_pad - N), (0, 0)))

    w1, b1, w2, b2, w3, b3 = _prepare_params(params)

    grid = (n_pad // tile,)
    full = lambda i: (0, 0)                          # grid-invariant blocks
    invariant = dict(pipeline_mode=pl.Buffered(1))   # no double-buffer for weights

    # Advisory cost estimate so XLA schedules the surrounding pad / slice well.
    mm_terms = IN_FEATURES * HIDDEN + HIDDEN * HIDDEN + HIDDEN * OUT_PADDED
    cost = pl.CostEstimate(
        flops=2 * n_pad * mm_terms,
        transcendentals=0,
        bytes_accessed=(n_pad * IN_FEATURES * 4          # x (f32)
                        + mm_terms * 2                   # weights (bf16)
                        + (2 * HIDDEN + OUT_PADDED) * 4  # biases (f32)
                        + n_pad * OUT_PADDED * 4),       # out (f32)
    )

    out = pl.pallas_call(
        mlp_kernel,
        out_shape=jax.ShapeDtypeStruct((n_pad, OUT_PADDED), jnp.float32),
        grid_spec=pltpu.PrefetchScalarGridSpec(
            num_scalar_prefetch=0,
            grid=grid,
            in_specs=[
                # x tile: last dim 784 == full array dim (legal non-128 block dim)
                pl.BlockSpec((tile, IN_FEATURES), lambda i: (i, 0)),
                pl.BlockSpec((IN_FEATURES, HIDDEN), full, **invariant),   # W1
                pl.BlockSpec((1, HIDDEN), full, **invariant),             # b1
                pl.BlockSpec((HIDDEN, HIDDEN), full, **invariant),        # W2
                pl.BlockSpec((1, HIDDEN), full, **invariant),             # b2
                pl.BlockSpec((HIDDEN, OUT_PADDED), full, **invariant),    # W3
                pl.BlockSpec((1, OUT_PADDED), full, **invariant),         # b3
            ],
            out_specs=pl.BlockSpec((tile, OUT_PADDED), lambda i: (i, 0)),
        ),
        compiler_params=pltpu.CompilerParams(
            dimension_semantics=("parallel",),       # batch axis -> megacore/2 TCs
            vmem_limit_bytes=48 * 1024 * 1024,       # tile<=1024 fits with headroom,
        ),                                           # stays under v7x's 64 MiB
        cost_estimate=cost,
    )(xp, w1, b1, w2, b2, w3, b3)

    # Strip batch padding and the lane padding of the final layer.
    return out[:N, :OUT_FEATURES]


def init_params(key):
    """PyTorch nn.Linear default init (U[-1/sqrt(fan_in), +1/sqrt(fan_in)]).
    Weights stored as (in_features, out_features); biases as (out_features,)."""
    def linear(key, fan_in, fan_out):
        kw, kb = jax.random.split(key)
        bound = 1.0 / jnp.sqrt(fan_in)
        w = jax.random.uniform(kw, (fan_in, fan_out), jnp.float32, -bound, bound)
        b = jax.random.uniform(kb, (fan_out,), jnp.float32, -bound, bound)
        return w, b

    k1, k2, k3 = jax.random.split(key, 3)
    w1, b1 = linear(k1, IN_FEATURES, HIDDEN)
    w2, b2 = linear(k2, HIDDEN, HIDDEN)
    w3, b3 = linear(k3, HIDDEN, OUT_FEATURES)
    return (w1, b1, w2, b2, w3, b3)


def reference_forward(x_nchw, params):
    """Pure-JAX f32 reference matching the PyTorch forward semantics."""
    w1, b1, w2, b2, w3, b3 = params
    x = x_nchw.reshape(x_nchw.shape[0], -1)
    h1 = jnp.maximum(x @ w1 + b1, 0.0)
    h2 = jnp.maximum(h1 @ w2 + b2, 0.0)
    return h2 @ w3 + b3


if __name__ == "__main__":
    key = jax.random.PRNGKey(0)
    k_params, k_x = jax.random.split(key)

    params = init_params(k_params)
    # Small batch of FashionMNIST-shaped inputs: (N, C=1, H=28, W=28), NCHW.
    x = jax.random.normal(k_x, (8, 1, 28, 28), dtype=jnp.float32)

    logits = neural_network_forward(x, params)
    logits = jax.block_until_ready(logits)

    ref = reference_forward(x, params)
    assert logits.shape == (8, 10)
    # bf16 matmul inputs (f32 accumulation) vs f32 reference -> loosened tolerance.
    assert jnp.allclose(logits, ref, atol=5e-2, rtol=5e-2), "mismatch vs JAX reference"

    print("KERNEL_OK")
</pallas_src>

<mosaic_0001>
module attributes {stable_mosaic.version = 11 : i64} {
  func.func @mlp_kernel(%arg0: i32, %arg1: memref<8x784xf32, #tpu.memory_space<vmem>>, %arg2: memref<784x512xbf16, #tpu.memory_space<vmem>>, %arg3: memref<1x512xf32, #tpu.memory_space<vmem>>, %arg4: memref<512x512xbf16, #tpu.memory_space<vmem>>, %arg5: memref<1x512xf32, #tpu.memory_space<vmem>>, %arg6: memref<512x128xbf16, #tpu.memory_space<vmem>>, %arg7: memref<1x128xf32, #tpu.memory_space<vmem>>, %arg8: memref<8x128xf32, #tpu.memory_space<vmem>>) attributes {dimension_semantics = [#tpu.dimension_semantics<parallel>], iteration_bounds = array<i64: 1>, scalar_prefetch = 0 : i64, scratch_operands = 0 : i64, tpu.core_type = #tpu.core_type<tc>, window_params = [{transform_indices = @transform_0, window_bounds = array<i64: 8, 784>}, {pipeline_mode = #tpu.pipeline_mode<synchronous>, transform_indices = @transform_1, window_bounds = array<i64: 784, 512>}, {pipeline_mode = #tpu.pipeline_mode<synchronous>, transform_indices = @transform_2, window_bounds = array<i64: 1, 512>}, {pipeline_mode = #tpu.pipeline_mode<synchronous>, transform_indices = @transform_3, window_bounds = array<i64: 512, 512>}, {pipeline_mode = #tpu.pipeline_mode<synchronous>, transform_indices = @transform_4, window_bounds = array<i64: 1, 512>}, {pipeline_mode = #tpu.pipeline_mode<synchronous>, transform_indices = @transform_5, window_bounds = array<i64: 512, 128>}, {pipeline_mode = #tpu.pipeline_mode<synchronous>, transform_indices = @transform_6, window_bounds = array<i64: 1, 128>}, {transform_indices = @transform_7, window_bounds = array<i64: 8, 128>}]} {
    %c0 = arith.constant 0 : index
    %c0_0 = arith.constant 0 : index
    %0 = vector.load %arg1[%c0, %c0_0] : memref<8x784xf32, #tpu.memory_space<vmem>>, vector<8x784xf32>
    %1 = arith.truncf %0 : vector<8x784xf32> to vector<8x784xbf16>
    %c0_1 = arith.constant 0 : index
    %c0_2 = arith.constant 0 : index
    %2 = vector.load %arg2[%c0_1, %c0_2] : memref<784x512xbf16, #tpu.memory_space<vmem>>, vector<784x512xbf16>
    %cst = arith.constant dense<0.000000e+00> : vector<8x512xf32>
    %3 = tpu.matmul %1, %2, %cst {dimension_numbers = #tpu.dot_dimension_numbers<[1], [0], [0], [1], [0, 0, 1, 1], [], []>} : vector<8x784xbf16>, vector<784x512xbf16>, vector<8x512xf32> -> vector<8x512xf32>
    %c0_3 = arith.constant 0 : index
    %c0_4 = arith.constant 0 : index
    %4 = vector.load %arg3[%c0_3, %c0_4] : memref<1x512xf32, #tpu.memory_space<vmem>>, vector<1x512xf32>
    %5 = vector.broadcast %4 : vector<1x512xf32> to vector<8x512xf32>
    %6 = arith.addf %3, %5 : vector<8x512xf32>
    %cst_5 = arith.constant 0.000000e+00 : f32
    %7 = vector.broadcast %cst_5 : f32 to vector<8x512xf32>
    %8 = arith.maximumf %6, %7 : vector<8x512xf32>
    %9 = arith.truncf %8 : vector<8x512xf32> to vector<8x512xbf16>
    %c0_6 = arith.constant 0 : index
    %c0_7 = arith.constant 0 : index
    %10 = vector.load %arg4[%c0_6, %c0_7] : memref<512x512xbf16, #tpu.memory_space<vmem>>, vector<512x512xbf16>
    %cst_8 = arith.constant dense<0.000000e+00> : vector<8x512xf32>
    %11 = tpu.matmul %9, %10, %cst_8 {dimension_numbers = #tpu.dot_dimension_numbers<[1], [0], [0], [1], [0, 0, 1, 1], [], []>} : vector<8x512xbf16>, vector<512x512xbf16>, vector<8x512xf32> -> vector<8x512xf32>
    %c0_9 = arith.constant 0 : index
    %c0_10 = arith.constant 0 : index
    %12 = vector.load %arg5[%c0_9, %c0_10] : memref<1x512xf32, #tpu.memory_space<vmem>>, vector<1x512xf32>
    %13 = vector.broadcast %12 : vector<1x512xf32> to vector<8x512xf32>
    %14 = arith.addf %11, %13 : vector<8x512xf32>
    %cst_11 = arith.constant 0.000000e+00 : f32
    %15 = vector.broadcast %cst_11 : f32 to vector<8x512xf32>
    %16 = arith.maximumf %14, %15 : vector<8x512xf32>
    %17 = arith.truncf %16 : vector<8x512xf32> to vector<8x512xbf16>
    %c0_12 = arith.constant 0 : index
    %c0_13 = arith.constant 0 : index
    %18 = vector.load %arg6[%c0_12, %c0_13] : memref<512x128xbf16, #tpu.memory_space<vmem>>, vector<512x128xbf16>
    %cst_14 = arith.constant dense<0.000000e+00> : vector<8x128xf32>
    %19 = tpu.matmul %17, %18, %cst_14 {dimension_numbers = #tpu.dot_dimension_numbers<[1], [0], [0], [1], [0, 0, 1, 1], [], []>} : vector<8x512xbf16>, vector<512x128xbf16>, vector<8x128xf32> -> vector<8x128xf32>
    %c0_15 = arith.constant 0 : index
    %c0_16 = arith.constant 0 : index
    %20 = vector.load %arg7[%c0_15, %c0_16] : memref<1x128xf32, #tpu.memory_space<vmem>>, vector<1x128xf32>
    %21 = vector.broadcast %20 : vector<1x128xf32> to vector<8x128xf32>
    %22 = arith.addf %19, %21 : vector<8x128xf32>
    %c0_17 = arith.constant 0 : index
    %c0_18 = arith.constant 0 : index
    %23 = vector.load %arg8[%c0_17, %c0_18] : memref<8x128xf32, #tpu.memory_space<vmem>>, vector<8x128xf32>
    tpu.vector_store %arg8[%c0_17, %c0_18], %22 {strides = array<i32>} : memref<8x128xf32, #tpu.memory_space<vmem>>, vector<8x128xf32>,
    return
  }
  func.func @transform_0(%arg0: i32) -> (i32, i32) {
    %c0_i32 = arith.constant 0 : i32
    %c0_i32_0 = arith.constant 0 : i32
    return %arg0, %c0_i32 : i32, i32
  }
  func.func @transform_1(%arg0: i32) -> (i32, i32) {
    %c0_i32 = arith.constant 0 : i32
    %c0_i32_0 = arith.constant 0 : i32
    %c0_i32_1 = arith.constant 0 : i32
    return %c0_i32, %c0_i32_0 : i32, i32
  }
  func.func @transform_2(%arg0: i32) -> (i32, i32) {
    %c0_i32 = arith.constant 0 : i32
    %c0_i32_0 = arith.constant 0 : i32
    %c0_i32_1 = arith.constant 0 : i32
    return %c0_i32, %c0_i32_0 : i32, i32
  }
  func.func @transform_3(%arg0: i32) -> (i32, i32) {
    %c0_i32 = arith.constant 0 : i32
    %c0_i32_0 = arith.constant 0 : i32
    %c0_i32_1 = arith.constant 0 : i32
    return %c0_i32, %c0_i32_0 : i32, i32
  }
  func.func @transform_4(%arg0: i32) -> (i32, i32) {
    %c0_i32 = arith.constant 0 : i32
    %c0_i32_0 = arith.constant 0 : i32
    %c0_i32_1 = arith.constant 0 : i32
    return %c0_i32, %c0_i32_0 : i32, i32
  }
  func.func @transform_5(%arg0: i32) -> (i32, i32) {
    %c0_i32 = arith.constant 0 : i32
    %c0_i32_0 = arith.constant 0 : i32
    %c0_i32_1 = arith.constant 0 : i32
    return %c0_i32, %c0_i32_0 : i32, i32
  }
  func.func @transform_6(%arg0: i32) -> (i32, i32) {
    %c0_i32 = arith.constant 0 : i32
    %c0_i32_0 = arith.constant 0 : i32
    %c0_i32_1 = arith.constant 0 : i32
    return %c0_i32, %c0_i32_0 : i32, i32
  }
  func.func @transform_7(%arg0: i32) -> (i32, i32) {
    %c0_i32 = arith.constant 0 : i32
    %c0_i32_0 = arith.constant 0 : i32
    return %arg0, %c0_i32 : i32, i32
  }
}

</mosaic_0001>

<llo_original>
// kernel: tpu_custom_call.1
$region0: #{tpu_custom_call.1}
  #allocation0 [shape = 'u32[]', space=smem, size = 0x4, offset = 0x4, fixed_abs, tag = 'smem constant byte address 0x4 - core index']
  #allocation1 [shape = 'u32[72,128]{1,0:T(1,128)}', space=vmem, size = 0x9000, scoped, tag = 'internal scratch']
  %s0 = inlined_call_operand.hbm [shape: f32[8,784], index: 0, kind: input, shape index: {}]
  %s1 = inlined_call_operand.hbm [shape: bf16[784,512], index: 1, kind: input, shape index: {}]
  %s2 = inlined_call_operand.hbm [shape: f32[1,512], index: 2, kind: input, shape index: {}]
  %s3 = inlined_call_operand.hbm [shape: bf16[512,512], index: 3, kind: input, shape index: {}]
  %s4 = inlined_call_operand.hbm [shape: f32[1,512], index: 4, kind: input, shape index: {}]
  %s5 = inlined_call_operand.hbm [shape: bf16[512,128], index: 5, kind: input, shape index: {}]
  %s6 = inlined_call_operand.vmem [shape: f32[1,128], index: 6, kind: input, shape index: {}]
  %s7 = inlined_call_operand.hbm [shape: f32[8,128], index: 7, kind: output, shape index: {}]
  %s8 = sld [smem:[#allocation0]]
  $region62: #{tpu_custom_call.1} parent=0
    _
  %s10 = ssub.s32 1, %s8
  %s11 = scalar_select 0, %s10, %s8
  $region1: #{tpu_custom_call.1} parent=0
    #allocation2 [shape = 'u8[28672]{0}', space=vmem, size = 0x7000, scoped, tag = 'input window, operand 0, single buffered']
    #allocation3 [shape = 's32[1]{0}', space=sflag, size = 0x4, scoped, tag = 'scoped memory for tpu_custom_call.1']
    #allocation4 [shape = 's32[1]{0}', space=sflag, size = 0x4, scoped, tag = 'scoped memory for tpu_custom_call.1']
    #allocation5 [shape = 'u8[802816]{0}', space=vmem, size = 0xc4000, scoped, tag = 'input window, operand 1, single buffered']
    #allocation6 [shape = 's32[1]{0}', space=sflag, size = 0x4, scoped, tag = 'scoped memory for tpu_custom_call.1']
    #allocation7 [shape = 'u8[2048]{0}', space=vmem, size = 0x800, scoped, tag = 'input window, operand 2, single buffered']
    #allocation8 [shape = 'u8[524288]{0}', space=vmem, size = 0x80000, scoped, tag = 'input window, operand 3, single buffered']
    #allocation9 [shape = 's32[1]{0}', space=sflag, size = 0x4, scoped, tag = 'scoped memory for tpu_custom_call.1']
    #allocation10 [shape = 'u8[2048]{0}', space=vmem, size = 0x800, scoped, tag = 'input window, operand 4, single buffered']
    #allocation11 [shape = 'u8[131072]{0}', space=vmem, size = 0x20000, scoped, tag = 'input window, operand 5, single buffered']
    #allocation12 [shape = 's32[1]{0}', space=sflag, size = 0x4, scoped, tag = 'scoped memory for tpu_custom_call.1']
    #allocation13 [shape = 'u8[4096]{0}', space=vmem, size = 0x1000, scoped, tag = 'output window, operand 0, single buffered']
    %12 = vsyncpa [#allocation3], 0
    %13 = vsyncpa [#allocation6], 0
    %14 = vsyncpa [#allocation9], 0
    %15 = vsyncpa [#allocation12], 0
    %16 = vsyncpa [#allocation4], 0
    // Predicated region
    $region2: #{tpu_custom_call.1} parent=1 // pred_check
      _
    $region3: #{tpu_custom_call.1} parent=1 // pred_check_branch
      %18 = sbr.rel (0) target = $region5
    $region4: #{tpu_custom_call.1} parent=1 // pred_region
      %20 = vsyncadd [#allocation3], 0
      %s22 = sshll.u32 %s0, 4
      %s23 = int_to_ptr.hbm [resolvable:$true] %s22
      %s24 = sshll.u32 [#allocation2], 4
      %s25 = int_to_ptr.vmem [resolvable:$true] %s24
      %27 = dma.hbm_to_vmem [thread:$0]  %s23, 896, %s25, [#allocation3]
    $region5: #{tpu_custom_call.1} parent=1 // pred_fallthru
      _
    // Predicated region
    $region6: #{tpu_custom_call.1} parent=1 // pred_check
      _
    $region7: #{tpu_custom_call.1} parent=1 // pred_check_branch
      %29 = sbr.rel (0) target = $region9
    $region8: #{tpu_custom_call.1} parent=1 // pred_region
      %31 = vsyncadd [#allocation6], 0
      %s32 = sshll.u32 %s1, 4
      %s33 = int_to_ptr.hbm [resolvable:$true] %s32
      %s34 = sshll.u32 [#allocation5], 4
      %s35 = int_to_ptr.vmem [resolvable:$true] %s34
      %40 = dma.hbm_to_vmem [thread:$0]  %s33, 25088, %s35, [#allocation6], 256, 256, 16
    $region9: #{tpu_custom_call.1} parent=1 // pred_fallthru
      _
    // Predicated region
    $region10: #{tpu_custom_call.1} parent=1 // pred_check
      _
    $region11: #{tpu_custom_call.1} parent=1 // pred_check_branch
      %42 = sbr.rel (0) target = $region13
    $region12: #{tpu_custom_call.1} parent=1 // pred_region
      %44 = vsyncadd [#allocation6], 0
      %s46 = sshll.u32 %s2, 4
      %s47 = int_to_ptr.hbm [resolvable:$true] %s46
      %s48 = sshll.u32 [#allocation7], 4
      %s49 = int_to_ptr.vmem [resolvable:$true] %s48
      %51 = dma.hbm_to_vmem [thread:$0]  %s47, 64, %s49, [#allocation6]
    $region13: #{tpu_custom_call.1} parent=1 // pred_fallthru
      _
    // Predicated region
    $region14: #{tpu_custom_call.1} parent=1 // pred_check
      _
    $region15: #{tpu_custom_call.1} parent=1 // pred_check_branch
      %53 = sbr.rel (0) target = $region17
    $region16: #{tpu_custom_call.1} parent=1 // pred_region
      %55 = vsyncadd [#allocation9], 0
      %s56 = sshll.u32 %s3, 4
      %s57 = int_to_ptr.hbm [resolvable:$true] %s56
      %s58 = sshll.u32 [#allocation8], 4
      %s59 = int_to_ptr.vmem [resolvable:$true] %s58
      %64 = dma.hbm_to_vmem [thread:$0]  %s57, 16384, %s59, [#allocation9], 256, 256, 16
    $region17: #{tpu_custom_call.1} parent=1 // pred_fallthru
      _
    // Predicated region
    $region18: #{tpu_custom_call.1} parent=1 // pred_check
      _
    $region19: #{tpu_custom_call.1} parent=1 // pred_check_branch
      %66 = sbr.rel (0) target = $region21
    $region20: #{tpu_custom_call.1} parent=1 // pred_region
      %68 = vsyncadd [#allocation9], 0
      %s70 = sshll.u32 %s4, 4
      %s71 = int_to_ptr.hbm [resolvable:$true] %s70
      %s72 = sshll.u32 [#allocation10], 4
      %s73 = int_to_ptr.vmem [resolvable:$true] %s72
      %75 = dma.hbm_to_vmem [thread:$0]  %s71, 64, %s73, [#allocation9]
    $region21: #{tpu_custom_call.1} parent=1 // pred_fallthru
      _
    // Predicated region
    $region22: #{tpu_custom_call.1} parent=1 // pred_check
      _
    $region23: #{tpu_custom_call.1} parent=1 // pred_check_branch
      %77 = sbr.rel (0) target = $region25
    $region24: #{tpu_custom_call.1} parent=1 // pred_region
      %79 = vsyncadd [#allocation12], 0
      %s80 = sshll.u32 %s5, 4
      %s81 = int_to_ptr.hbm [resolvable:$true] %s80
      %s82 = sshll.u32 [#allocation11], 4
      %s83 = int_to_ptr.vmem [resolvable:$true] %s82
      %88 = dma.hbm_to_vmem [thread:$0]  %s81, 4096, %s83, [#allocation12], 64, 64, 4
    $region25: #{tpu_custom_call.1} parent=1 // pred_fallthru
      _
    // Predicated region
    $region26: #{tpu_custom_call.1} parent=1 // pred_check
      _
    $region27: #{tpu_custom_call.1} parent=1 // pred_check_branch
      %90 = sbr.rel (0) target = $region29
    $region28: #{tpu_custom_call.1} parent=1 // pred_region
      _
    $region29: #{tpu_custom_call.1} parent=1 // pred_fallthru
      _
    // Predicated region
    $region30: #{tpu_custom_call.1} parent=1 // pred_check
      _
    $region31: #{tpu_custom_call.1} parent=1 // pred_check_branch
      %92 = sbr.rel (0) target = $region33
    $region32: #{tpu_custom_call.1} parent=1 // pred_region
      %94 = dma.done [#allocation3], 896
    $region33: #{tpu_custom_call.1} parent=1 // pred_fallthru
      _
    // Predicated region
    $region34: #{tpu_custom_call.1} parent=1 // pred_check
      _
    $region35: #{tpu_custom_call.1} parent=1 // pred_check_branch
      %96 = sbr.rel (0) target = $region37
    $region36: #{tpu_custom_call.1} parent=1 // pred_region
      %98 = dma.done [#allocation6], 25088
    $region37: #{tpu_custom_call.1} parent=1 // pred_fallthru
      _
    // Predicated region
    $region38: #{tpu_custom_call.1} parent=1 // pred_check
      _
    $region39: #{tpu_custom_call.1} parent=1 // pred_check_branch
      %100 = sbr.rel (0) target = $region41
    $region40: #{tpu_custom_call.1} parent=1 // pred_region
      %102 = dma.done [#allocation6], 64
    $region41: #{tpu_custom_call.1} parent=1 // pred_fallthru
      _
    // Predicated region
    $region42: #{tpu_custom_call.1} parent=1 // pred_check
      _
    $region43: #{tpu_custom_call.1} parent=1 // pred_check_branch
      %104 = sbr.rel (0) target = $region45
    $region44: #{tpu_custom_call.1} parent=1 // pred_region
      %106 = dma.done [#allocation9], 16384
    $region45: #{tpu_custom_call.1} parent=1 // pred_fallthru
      _
    // Predicated region
    $region46: #{tpu_custom_call.1} parent=1 // pred_check
      _
    $region47: #{tpu_custom_call.1} parent=1 // pred_check_branch
      %108 = sbr.rel (0) target = $region49
    $region48: #{tpu_custom_call.1} parent=1 // pred_region
      %110 = dma.done [#allocation9], 64
    $region49: #{tpu_custom_call.1} parent=1 // pred_fallthru
      _
    // Predicated region
    $region50: #{tpu_custom_call.1} parent=1 // pred_check
      _
    $region51: #{tpu_custom_call.1} parent=1 // pred_check_branch
      %112 = sbr.rel (0) target = $region53
    $region52: #{tpu_custom_call.1} parent=1 // pred_region
      %114 = dma.done [#allocation12], 4096
    $region53: #{tpu_custom_call.1} parent=1 // pred_fallthru
      _
    %v116 = vld [vmem:[#allocation2] sm:$0xff]
    %v117 = vld [vmem:[#allocation2 + $0x8] sm:$0xff]
    %v118 = vld [vmem:[#allocation2 + $0x10] sm:$0xff]
    %v119 = vld [vmem:[#allocation2 + $0x18] sm:$0xff]
    %v120 = vld [vmem:[#allocation2 + $0x20] sm:$0xff]
    %v121 = vld [vmem:[#allocation2 + $0x28] sm:$0xff]
    %v122 = vld [vmem:[#allocation2 + $0x30] sm:$0xff]
    %v123 = vpack.c.bf16 %v116, %v116
    %v124 = vpack.c.bf16 %v117, %v117
    %v125 = vpack.c.bf16 %v118, %v118
    %v126 = vpack.c.bf16 %v119, %v119
    %v127 = vpack.c.bf16 %v120, %v120
    %v128 = vpack.c.bf16 %v121, %v121
    %v129 = vpack.c.bf16 %v122, %v122
    %v130 = vld [vmem:[#allocation5] sm:$0xff]
    %v131 = vld [vmem:[#allocation5 + $0x8] sm:$0xff]
    %v132 = vld [vmem:[#allocation5 + $0x10] sm:$0xff]
    %v133 = vld [vmem:[#allocation5 + $0x18] sm:$0xff]
    %v134 = vld [vmem:[#allocation5 + $0x20] sm:$0xff]
    %v135 = vld [vmem:[#allocation5 + $0x28] sm:$0xff]
    %v136 = vld [vmem:[#allocation5 + $0x30] sm:$0xff]
    %v137 = vld [vmem:[#allocation5 + $0x38] sm:$0xff]
    %v138 = vld [vmem:[#allocation5 + $0x40] sm:$0xff]
    %v139 = vld [vmem:[#allocation5 + $0x48] sm:$0xff]
    %v140 = vld [vmem:[#allocation5 + $0x50] sm:$0xff]
    %v141 = vld [vmem:[#allocation5 + $0x58] sm:$0xff]
    %v142 = vld [vmem:[#allocation5 + $0x60] sm:$0xff]
    %v143 = vld [vmem:[#allocation5 + $0x68] sm:$0xff]
    %v144 = vld [vmem:[#allocation5 + $0x70] sm:$0xff]
    %v145 = vld [vmem:[#allocation5 + $0x78] sm:$0xff]
    %v146 = vld [vmem:[#allocation5 + $0x80] sm:$0xff]
    %v147 = vld [vmem:[#allocation5 + $0x88] sm:$0xff]
    %v148 = vld [vmem:[#allocation5 + $0x90] sm:$0xff]
    %v149 = vld [vmem:[#allocation5 + $0x98] sm:$0xff]
    %v150 = vld [vmem:[#allocation5 + $0xa0] sm:$0xff]
    %v151 = vld [vmem:[#allocation5 + $0xa8] sm:$0xff]
    %v152 = vld [vmem:[#allocation5 + $0xb0] sm:$0xff]
    %v153 = vld [vmem:[#allocation5 + $0xb8] sm:$0xff]
    %v154 = vld [vmem:[#allocation5 + $0xc0] sm:$0xff]
    %v155 = vld [vmem:[#allocation5 + $0xc8] sm:$0xff]
    %v156 = vld [vmem:[#allocation5 + $0xd0] sm:$0xff]
    %v157 = vld [vmem:[#allocation5 + $0xd8] sm:$0xff]
    %v158 = vld [vmem:[#allocation5 + $0xe0] sm:$0xff]
    %v159 = vld [vmem:[#allocation5 + $0xe8] sm:$0xff]
    %v160 = vld [vmem:[#allocation5 + $0xf0] sm:$0xff]
    %v161 = vld [vmem:[#allocation5 + $0xf8] sm:$0xff]
    %v162 = vld [vmem:[#allocation5 + $0x100] sm:$0xff]
    %v163 = vld [vmem:[#allocation5 + $0x108] sm:$0xff]
    %v164 = vld [vmem:[#allocation5 + $0x110] sm:$0xff]
    %v165 = vld [vmem:[#allocation5 + $0x118] sm:$0xff]
    %v166 = vld [vmem:[#allocation5 + $0x120] sm:$0xff]
    %v167 = vld [vmem:[#allocation5 + $0x128] sm:$0xff]
    %v168 = vld [vmem:[#allocation5 + $0x130] sm:$0xff]
    %v169 = vld [vmem:[#allocation5 + $0x138] sm:$0xff]
    %v170 = vld [vmem:[#allocation5 + $0x140] sm:$0xff]
    %v171 = vld [vmem:[#allocation5 + $0x148] sm:$0xff]
    %v172 = vld [vmem:[#allocation5 + $0x150] sm:$0xff]
    %v173 = vld [vmem:[#allocation5 + $0x158] sm:$0xff]
    %v174 = vld [vmem:[#allocation5 + $0x160] sm:$0xff]
    %v175 = vld [vmem:[#allocation5 + $0x168] sm:$0xff]
    %v176 = vld [vmem:[#allocation5 + $0x170] sm:$0xff]
    %v177 = vld [vmem:[#allocation5 + $0x178] sm:$0xff]
    %v178 = vld [vmem:[#allocation5 + $0x180] sm:$0xff]
    %v179 = vld [vmem:[#allocation5 + $0x188] sm:$0xff]
    %v180 = vld [vmem:[#allocation5 + $0x190] sm:$0xff]
    %v181 = vld [vmem:[#allocation5 + $0x198] sm:$0xff]
    %v182 = vld [vmem:[#allocation5 + $0x1a0] sm:$0xff]
    %v183 = vld [vmem:[#allocation5 + $0x1a8] sm:$0xff]
    %v184 = vld [vmem:[#allocation5 + $0x1b0] sm:$0xff]
    %v185 = vld [vmem:[#allocation5 + $0x1b8] sm:$0xff]
    %v186 = vld [vmem:[#allocation5 + $0x1c0] sm:$0xff]
    %v187 = vld [vmem:[#allocation5 + $0x1c8] sm:$0xff]
    %v188 = vld [vmem:[#allocation5 + $0x1d0] sm:$0xff]
    %v189 = vld [vmem:[#allocation5 + $0x1d8] sm:$0xff]
    %v190 = vld [vmem:[#allocation5 + $0x1e0] sm:$0xff]
    %v191 = vld [vmem:[#allocation5 + $0x1e8] sm:$0xff]
    %v192 = vld [vmem:[#allocation5 + $0x1f0] sm:$0xff]
    %v193 = vld [vmem:[#allocation5 + $0x1f8] sm:$0xff]
    %v194 = vld [vmem:[#allocation5 + $0x200] sm:$0xff]
    %v195 = vld [vmem:[#allocation5 + $0x208] sm:$0xff]
    %v196 = vld [vmem:[#allocation5 + $0x210] sm:$0xff]
    %v197 = vld [vmem:[#allocation5 + $0x218] sm:$0xff]
    %v198 = vld [vmem:[#allocation5 + $0x220] sm:$0xff]
    %v199 = vld [vmem:[#allocation5 + $0x228] sm:$0xff]
    %v200 = vld [vmem:[#allocation5 + $0x230] sm:$0xff]
    %v201 = vld [vmem:[#allocation5 + $0x238] sm:$0xff]
    %v202 = vld [vmem:[#allocation5 + $0x240] sm:$0xff]
    %v203 = vld [vmem:[#allocation5 + $0x248] sm:$0xff]
    %v204 = vld [vmem:[#allocation5 + $0x250] sm:$0xff]
    %v205 = vld [vmem:[#allocation5 + $0x258] sm:$0xff]
    %v206 = vld [vmem:[#allocation5 + $0x260] sm:$0xff]
    %v207 = vld [vmem:[#allocation5 + $0x268] sm:$0xff]
    %v208 = vld [vmem:[#allocation5 + $0x270] sm:$0xff]
    %v209 = vld [vmem:[#allocation5 + $0x278] sm:$0xff]
    %v210 = vld [vmem:[#allocation5 + $0x280] sm:$0xff]
    %v211 = vld [vmem:[#allocation5 + $0x288] sm:$0xff]
    %v212 = vld [vmem:[#allocation5 + $0x290] sm:$0xff]
    %v213 = vld [vmem:[#allocation5 + $0x298] sm:$0xff]
    %v214 = vld [vmem:[#allocation5 + $0x2a0] sm:$0xff]
    %v215 = vld [vmem:[#allocation5 + $0x2a8] sm:$0xff]
    %v216 = vld [vmem:[#allocation5 + $0x2b0] sm:$0xff]
    %v217 = vld [vmem:[#allocation5 + $0x2b8] sm:$0xff]
    %v218 = vld [vmem:[#allocation5 + $0x2c0] sm:$0xff]
    %v219 = vld [vmem:[#allocation5 + $0x2c8] sm:$0xff]
    %v220 = vld [vmem:[#allocation5 + $0x2d0] sm:$0xff]
    %v221 = vld [vmem:[#allocation5 + $0x2d8] sm:$0xff]
    %v222 = vld [vmem:[#allocation5 + $0x2e0] sm:$0xff]
    %v223 = vld [vmem:[#allocation5 + $0x2e8] sm:$0xff]
    %v224 = vld [vmem:[#allocation5 + $0x2f0] sm:$0xff]
    %v225 = vld [vmem:[#allocation5 + $0x2f8] sm:$0xff]
    %v226 = vld [vmem:[#allocation5 + $0x300] sm:$0xff]
    %v227 = vld [vmem:[#allocation5 + $0x308] sm:$0xff]
    %v228 = vld [vmem:[#allocation5 + $0x310] sm:$0xff]
    %v229 = vld [vmem:[#allocation5 + $0x318] sm:$0xff]
    %v230 = vld [vmem:[#allocation5 + $0x320] sm:$0xff]
    %v231 = vld [vmem:[#allocation5 + $0x328] sm:$0xff]
    %v232 = vld [vmem:[#allocation5 + $0x330] sm:$0xff]
    %v233 = vld [vmem:[#allocation5 + $0x338] sm:$0xff]
    %v234 = vld [vmem:[#allocation5 + $0x340] sm:$0xff]
    %v235 = vld [vmem:[#allocation5 + $0x348] sm:$0xff]
    %v236 = vld [vmem:[#allocation5 + $0x350] sm:$0xff]
    %v237 = vld [vmem:[#allocation5 + $0x358] sm:$0xff]
    %v238 = vld [vmem:[#allocation5 + $0x360] sm:$0xff]
    %v239 = vld [vmem:[#allocation5 + $0x368] sm:$0xff]
    %v240 = vld [vmem:[#allocation5 + $0x370] sm:$0xff]
    %v241 = vld [vmem:[#allocation5 + $0x378] sm:$0xff]
    %v242 = vld [vmem:[#allocation5 + $0x380] sm:$0xff]
    %v243 = vld [vmem:[#allocation5 + $0x388] sm:$0xff]
    %v244 = vld [vmem:[#allocation5 + $0x390] sm:$0xff]
    %v245 = vld [vmem:[#allocation5 + $0x398] sm:$0xff]
    %v246 = vld [vmem:[#allocation5 + $0x3a0] sm:$0xff]
    %v247 = vld [vmem:[#allocation5 + $0x3a8] sm:$0xff]
    %v248 = vld [vmem:[#allocation5 + $0x3b0] sm:$0xff]
    %v249 = vld [vmem:[#allocation5 + $0x3b8] sm:$0xff]
    %v250 = vld [vmem:[#allocation5 + $0x3c0] sm:$0xff]
    %v251 = vld [vmem:[#allocation5 + $0x3c8] sm:$0xff]
    %v252 = vld [vmem:[#allocation5 + $0x3d0] sm:$0xff]
    %v253 = vld [vmem:[#allocation5 + $0x3d8] sm:$0xff]
    %v254 = vld [vmem:[#allocation5 + $0x3e0] sm:$0xff]
    %v255 = vld [vmem:[#allocation5 + $0x3e8] sm:$0xff]
    %v256 = vld [vmem:[#allocation5 + $0x3f0] sm:$0xff]
    %v257 = vld [vmem:[#allocation5 + $0x3f8] sm:$0xff]
    %v258 = vld [vmem:[#allocation5 + $0x400] sm:$0xff]
    %v259 = vld [vmem:[#allocation5 + $0x408] sm:$0xff]
    %v260 = vld [vmem:[#allocation5 + $0x410] sm:$0xff]
    %v261 = vld [vmem:[#allocation5 + $0x418] sm:$0xff]
    %v262 = vld [vmem:[#allocation5 + $0x420] sm:$0xff]
    %v263 = vld [vmem:[#allocation5 + $0x428] sm:$0xff]
    %v264 = vld [vmem:[#allocation5 + $0x430] sm:$0xff]
    %v265 = vld [vmem:[#allocation5 + $0x438] sm:$0xff]
    %v266 = vld [vmem:[#allocation5 + $0x440] sm:$0xff]
    %v267 = vld [vmem:[#allocation5 + $0x448] sm:$0xff]
    %v268 = vld [vmem:[#allocation5 + $0x450] sm:$0xff]
    %v269 = vld [vmem:[#allocation5 + $0x458] sm:$0xff]
    %v270 = vld [vmem:[#allocation5 + $0x460] sm:$0xff]
    %v271 = vld [vmem:[#allocation5 + $0x468] sm:$0xff]
    %v272 = vld [vmem:[#allocation5 + $0x470] sm:$0xff]
    %v273 = vld [vmem:[#allocation5 + $0x478] sm:$0xff]
    %v274 = vld [vmem:[#allocation5 + $0x480] sm:$0xff]
    %v275 = vld [vmem:[#allocation5 + $0x488] sm:$0xff]
    %v276 = vld [vmem:[#allocation5 + $0x490] sm:$0xff]
    %v277 = vld [vmem:[#allocation5 + $0x498] sm:$0xff]
    %v278 = vld [vmem:[#allocation5 + $0x4a0] sm:$0xff]
    %v279 = vld [vmem:[#allocation5 + $0x4a8] sm:$0xff]
    %v280 = vld [vmem:[#allocation5 + $0x4b0] sm:$0xff]
    %v281 = vld [vmem:[#allocation5 + $0x4b8] sm:$0xff]
    %v282 = vld [vmem:[#allocation5 + $0x4c0] sm:$0xff]
    %v283 = vld [vmem:[#allocation5 + $0x4c8] sm:$0xff]
    %v284 = vld [vmem:[#allocation5 + $0x4d0] sm:$0xff]
    %v285 = vld [vmem:[#allocation5 + $0x4d8] sm:$0xff]
    %v286 = vld [vmem:[#allocation5 + $0x4e0] sm:$0xff]
    %v287 = vld [vmem:[#allocation5 + $0x4e8] sm:$0xff]
    %v288 = vld [vmem:[#allocation5 + $0x4f0] sm:$0xff]
    %v289 = vld [vmem:[#allocation5 + $0x4f8] sm:$0xff]
    %v290 = vld [vmem:[#allocation5 + $0x500] sm:$0xff]
    %v291 = vld [vmem:[#allocation5 + $0x508] sm:$0xff]
    %v292 = vld [vmem:[#allocation5 + $0x510] sm:$0xff]
    %v293 = vld [vmem:[#allocation5 + $0x518] sm:$0xff]
    %v294 = vld [vmem:[#allocation5 + $0x520] sm:$0xff]
    %v295 = vld [vmem:[#allocation5 + $0x528] sm:$0xff]
    %v296 = vld [vmem:[#allocation5 + $0x530] sm:$0xff]
    %v297 = vld [vmem:[#allocation5 + $0x538] sm:$0xff]
    %v298 = vld [vmem:[#allocation5 + $0x540] sm:$0xff]
    %v299 = vld [vmem:[#allocation5 + $0x548] sm:$0xff]
    %v300 = vld [vmem:[#allocation5 + $0x550] sm:$0xff]
    %v301 = vld [vmem:[#allocation5 + $0x558] sm:$0xff]
    %v302 = vld [vmem:[#allocation5 + $0x560] sm:$0xff]
    %v303 = vld [vmem:[#allocation5 + $0x568] sm:$0xff]
    %v304 = vld [vmem:[#allocation5 + $0x570] sm:$0xff]
    %v305 = vld [vmem:[#allocation5 + $0x578] sm:$0xff]
    %v306 = vld [vmem:[#allocation5 + $0x580] sm:$0xff]
    %v307 = vld [vmem:[#allocation5 + $0x588] sm:$0xff]
    %v308 = vld [vmem:[#allocation5 + $0x590] sm:$0xff]
    %v309 = vld [vmem:[#allocation5 + $0x598] sm:$0xff]
    %v310 = vld [vmem:[#allocation5 + $0x5a0] sm:$0xff]
    %v311 = vld [vmem:[#allocation5 + $0x5a8] sm:$0xff]
    %v312 = vld [vmem:[#allocation5 + $0x5b0] sm:$0xff]
    %v313 = vld [vmem:[#allocation5 + $0x5b8] sm:$0xff]
    %v314 = vld [vmem:[#allocation5 + $0x5c0] sm:$0xff]
    %v315 = vld [vmem:[#allocation5 + $0x5c8] sm:$0xff]
    %v316 = vld [vmem:[#allocation5 + $0x5d0] sm:$0xff]
    %v317 = vld [vmem:[#allocation5 + $0x5d8] sm:$0xff]
    %v318 = vld [vmem:[#allocation5 + $0x5e0] sm:$0xff]
    %v319 = vld [vmem:[#allocation5 + $0x5e8] sm:$0xff]
    %v320 = vld [vmem:[#allocation5 + $0x5f0] sm:$0xff]
    %v321 = vld [vmem:[#allocation5 + $0x5f8] sm:$0xff]
    %v322 = vld [vmem:[#allocation5 + $0x600] sm:$0xff]
    %v323 = vld [vmem:[#allocation5 + $0x608] sm:$0xff]
    %v324 = vld [vmem:[#allocation5 + $0x610] sm:$0xff]
    %v325 = vld [vmem:[#allocation5 + $0x618] sm:$0xff]
    %v326 = vld [vmem:[#allocation7] sm:$0xf]
    %v328 = vperm.slane %v326, 0
    %v329 = vperm.slane %v326, 1
    %v330 = vperm.slane %v326, 2
    %v331 = vperm.slane %v326, 3
    %v532 = vunpack.c.l.b16 %v130
    %v533 = vunpack.c.h.b16 %v130
    %v534 = vunpack.c.l.b16 %v131
    %v535 = vunpack.c.h.b16 %v131
    %v536 = vunpack.c.l.b16 %v132
    %v537 = vunpack.c.h.b16 %v132
    %v538 = vunpack.c.l.b16 %v133
    %v539 = vunpack.c.h.b16 %v133
    %v540 = vunpack.c.l.b16 %v134
    %v541 = vunpack.c.h.b16 %v134
    %v542 = vunpack.c.l.b16 %v135
    %v543 = vunpack.c.h.b16 %v135
    %v544 = vunpack.c.l.b16 %v136
    %v545 = vunpack.c.h.b16 %v136
    %v546 = vunpack.c.l.b16 %v137
    %v547 = vunpack.c.h.b16 %v137
    %v548 = vunpack.c.l.b16 %v138
    %v549 = vunpack.c.h.b16 %v138
    %v550 = vunpack.c.l.b16 %v139
    %v551 = vunpack.c.h.b16 %v139
    %v552 = vunpack.c.l.b16 %v140
    %v553 = vunpack.c.h.b16 %v140
    %v554 = vunpack.c.l.b16 %v141
    %v555 = vunpack.c.h.b16 %v141
    %v556 = vunpack.c.l.b16 %v142
    %v557 = vunpack.c.h.b16 %v142
    %v558 = vunpack.c.l.b16 %v143
    %v559 = vunpack.c.h.b16 %v143
    %v560 = vunpack.c.l.b16 %v144
    %v561 = vunpack.c.h.b16 %v144
    %v562 = vunpack.c.l.b16 %v145
    %v563 = vunpack.c.h.b16 %v145
    %v564 = vunpack.c.l.b16 %v146
    %v565 = vunpack.c.h.b16 %v146
    %v566 = vunpack.c.l.b16 %v147
    %v567 = vunpack.c.h.b16 %v147
    %v568 = vunpack.c.l.b16 %v148
    %v569 = vunpack.c.h.b16 %v148
    %v570 = vunpack.c.l.b16 %v149
    %v571 = vunpack.c.h.b16 %v149
    %v572 = vunpack.c.l.b16 %v150
    %v573 = vunpack.c.h.b16 %v150
    %v574 = vunpack.c.l.b16 %v151
    %v575 = vunpack.c.h.b16 %v151
    %v576 = vunpack.c.l.b16 %v152
    %v577 = vunpack.c.h.b16 %v152
    %v578 = vunpack.c.l.b16 %v153
    %v579 = vunpack.c.h.b16 %v153
    %v580 = vunpack.c.l.b16 %v154
    %v581 = vunpack.c.h.b16 %v154
    %v582 = vunpack.c.l.b16 %v155
    %v583 = vunpack.c.h.b16 %v155
    %v584 = vunpack.c.l.b16 %v156
    %v585 = vunpack.c.h.b16 %v156
    %v586 = vunpack.c.l.b16 %v157
    %v587 = vunpack.c.h.b16 %v157
    %v588 = vunpack.c.l.b16 %v158
    %v589 = vunpack.c.h.b16 %v158
    %v590 = vunpack.c.l.b16 %v159
    %v591 = vunpack.c.h.b16 %v159
    %v592 = vunpack.c.l.b16 %v160
    %v593 = vunpack.c.h.b16 %v160
    %v594 = vunpack.c.l.b16 %v161
    %v595 = vunpack.c.h.b16 %v161
    %v596 = vunpack.c.l.b16 %v162
    %v597 = vunpack.c.h.b16 %v162
    %v598 = vunpack.c.l.b16 %v163
    %v599 = vunpack.c.h.b16 %v163
    %v600 = vunpack.c.l.b16 %v164
    %v601 = vunpack.c.h.b16 %v164
    %v602 = vunpack.c.l.b16 %v165
    %v603 = vunpack.c.h.b16 %v165
    %v604 = vunpack.c.l.b16 %v166
    %v605 = vunpack.c.h.b16 %v166
    %v606 = vunpack.c.l.b16 %v167
    %v607 = vunpack.c.h.b16 %v167
    %v608 = vunpack.c.l.b16 %v168
    %v609 = vunpack.c.h.b16 %v168
    %v610 = vunpack.c.l.b16 %v169
    %v611 = vunpack.c.h.b16 %v169
    %v612 = vunpack.c.l.b16 %v170
    %v613 = vunpack.c.h.b16 %v170
    %v614 = vunpack.c.l.b16 %v171
    %v615 = vunpack.c.h.b16 %v171
    %v616 = vunpack.c.l.b16 %v172
    %v617 = vunpack.c.h.b16 %v172
    %v618 = vunpack.c.l.b16 %v173
    %v619 = vunpack.c.h.b16 %v173
    %v620 = vunpack.c.l.b16 %v174
    %v621 = vunpack.c.h.b16 %v174
    %v622 = vunpack.c.l.b16 %v175
    %v623 = vunpack.c.h.b16 %v175
    %v624 = vunpack.c.l.b16 %v176
    %v625 = vunpack.c.h.b16 %v176
    %v626 = vunpack.c.l.b16 %v177
    %v627 = vunpack.c.h.b16 %v177
    %v628 = vunpack.c.l.b16 %v178
    %v629 = vunpack.c.h.b16 %v178
    %v630 = vunpack.c.l.b16 %v179
    %v631 = vunpack.c.h.b16 %v179
    %v632 = vunpack.c.l.b16 %v180
    %v633 = vunpack.c.h.b16 %v180
    %v634 = vunpack.c.l.b16 %v181
    %v635 = vunpack.c.h.b16 %v181
    %v636 = vunpack.c.l.b16 %v182
    %v637 = vunpack.c.h.b16 %v182
    %v638 = vunpack.c.l.b16 %v183
    %v639 = vunpack.c.h.b16 %v183
    %v640 = vunpack.c.l.b16 %v184
    %v641 = vunpack.c.h.b16 %v184
    %v642 = vunpack.c.l.b16 %v185
    %v643 = vunpack.c.h.b16 %v185
    %v644 = vunpack.c.l.b16 %v186
    %v645 = vunpack.c.h.b16 %v186
    %v646 = vunpack.c.l.b16 %v187
    %v647 = vunpack.c.h.b16 %v187
    %v648 = vunpack.c.l.b16 %v188
    %v649 = vunpack.c.h.b16 %v188
    %v650 = vunpack.c.l.b16 %v189
    %v651 = vunpack.c.h.b16 %v189
    %v652 = vunpack.c.l.b16 %v190
    %v653 = vunpack.c.h.b16 %v190
    %v654 = vunpack.c.l.b16 %v191
    %v655 = vunpack.c.h.b16 %v191
    %v656 = vunpack.c.l.b16 %v192
    %v657 = vunpack.c.h.b16 %v192
    %v658 = vunpack.c.l.b16 %v193
    %v659 = vunpack.c.h.b16 %v193
    %v660 = vunpack.c.l.b16 %v194
    %v661 = vunpack.c.h.b16 %v194
    %v662 = vunpack.c.l.b16 %v195
    %v663 = vunpack.c.h.b16 %v195
    %v664 = vunpack.c.l.b16 %v196
    %v665 = vunpack.c.h.b16 %v196
    %v666 = vunpack.c.l.b16 %v197
    %v667 = vunpack.c.h.b16 %v197
    %v668 = vunpack.c.l.b16 %v198
    %v669 = vunpack.c.h.b16 %v198
    %v670 = vunpack.c.l.b16 %v199
    %v671 = vunpack.c.h.b16 %v199
    %v672 = vunpack.c.l.b16 %v200
    %v673 = vunpack.c.h.b16 %v200
    %v674 = vunpack.c.l.b16 %v201
    %v675 = vunpack.c.h.b16 %v201
    %v676 = vunpack.c.l.b16 %v202
    %v677 = vunpack.c.h.b16 %v202
    %v678 = vunpack.c.l.b16 %v203
    %v679 = vunpack.c.h.b16 %v203
    %v680 = vunpack.c.l.b16 %v204
    %v681 = vunpack.c.h.b16 %v204
    %v682 = vunpack.c.l.b16 %v205
    %v683 = vunpack.c.h.b16 %v205
    %v684 = vunpack.c.l.b16 %v206
    %v685 = vunpack.c.h.b16 %v206
    %v686 = vunpack.c.l.b16 %v207
    %v687 = vunpack.c.h.b16 %v207
    %v688 = vunpack.c.l.b16 %v208
    %v689 = vunpack.c.h.b16 %v208
    %v690 = vunpack.c.l.b16 %v209
    %v691 = vunpack.c.h.b16 %v209
    %v692 = vunpack.c.l.b16 %v210
    %v693 = vunpack.c.h.b16 %v210
    %v694 = vunpack.c.l.b16 %v211
    %v695 = vunpack.c.h.b16 %v211
    %v696 = vunpack.c.l.b16 %v212
    %v697 = vunpack.c.h.b16 %v212
    %v698 = vunpack.c.l.b16 %v213
    %v699 = vunpack.c.h.b16 %v213
    %v700 = vunpack.c.l.b16 %v214
    %v701 = vunpack.c.h.b16 %v214
    %v702 = vunpack.c.l.b16 %v215
    %v703 = vunpack.c.h.b16 %v215
    %v704 = vunpack.c.l.b16 %v216
    %v705 = vunpack.c.h.b16 %v216
    %v706 = vunpack.c.l.b16 %v217
    %v707 = vunpack.c.h.b16 %v217
    %v708 = vunpack.c.l.b16 %v218
    %v709 = vunpack.c.h.b16 %v218
    %v710 = vunpack.c.l.b16 %v219
    %v711 = vunpack.c.h.b16 %v219
    %v712 = vunpack.c.l.b16 %v220
    %v713 = vunpack.c.h.b16 %v220
    %v714 = vunpack.c.l.b16 %v221
    %v715 = vunpack.c.h.b16 %v221
    %v716 = vunpack.c.l.b16 %v222
    %v717 = vunpack.c.h.b16 %v222
    %v718 = vunpack.c.l.b16 %v223
    %v719 = vunpack.c.h.b16 %v223
    %v720 = vunpack.c.l.b16 %v224
    %v721 = vunpack.c.h.b16 %v224
    %v722 = vunpack.c.l.b16 %v225
    %v723 = vunpack.c.h.b16 %v225
    %v724 = vunpack.c.l.b16 %v226
    %v725 = vunpack.c.h.b16 %v226
    %v726 = vunpack.c.l.b16 %v227
    %v727 = vunpack.c.h.b16 %v227
    %v728 = vunpack.c.l.b16 %v228
    %v729 = vunpack.c.h.b16 %v228
    %v730 = vunpack.c.l.b16 %v229
    %v731 = vunpack.c.h.b16 %v229
    %v732 = vunpack.c.l.b16 %v230
    %v733 = vunpack.c.h.b16 %v230
    %v734 = vunpack.c.l.b16 %v231
    %v735 = vunpack.c.h.b16 %v231
    %v736 = vunpack.c.l.b16 %v232
    %v737 = vunpack.c.h.b16 %v232
    %v738 = vunpack.c.l.b16 %v233
    %v739 = vunpack.c.h.b16 %v233
    %v740 = vunpack.c.l.b16 %v234
    %v741 = vunpack.c.h.b16 %v234
    %v742 = vunpack.c.l.b16 %v235
    %v743 = vunpack.c.h.b16 %v235
    %v744 = vunpack.c.l.b16 %v236
    %v745 = vunpack.c.h.b16 %v236
    %v746 = vunpack.c.l.b16 %v237
    %v747 = vunpack.c.h.b16 %v237
    %v748 = vunpack.c.l.b16 %v238
    %v749 = vunpack.c.h.b16 %v238
    %v750 = vunpack.c.l.b16 %v239
    %v751 = vunpack.c.h.b16 %v239
    %v752 = vunpack.c.l.b16 %v240
    %v753 = vunpack.c.h.b16 %v240
    %v754 = vunpack.c.l.b16 %v241
    %v755 = vunpack.c.h.b16 %v241
    %v756 = vunpack.c.l.b16 %v242
    %v757 = vunpack.c.h.b16 %v242
    %v758 = vunpack.c.l.b16 %v243
    %v759 = vunpack.c.h.b16 %v243
    %v760 = vunpack.c.l.b16 %v244
    %v761 = vunpack.c.h.b16 %v244
    %v762 = vunpack.c.l.b16 %v245
    %v763 = vunpack.c.h.b16 %v245
    %v764 = vunpack.c.l.b16 %v246
    %v765 = vunpack.c.h.b16 %v246
    %v766 = vunpack.c.l.b16 %v247
    %v767 = vunpack.c.h.b16 %v247
    %v768 = vunpack.c.l.b16 %v248
    %v769 = vunpack.c.h.b16 %v248
    %v770 = vunpack.c.l.b16 %v249
    %v771 = vunpack.c.h.b16 %v249
    %v772 = vunpack.c.l.b16 %v250
    %v773 = vunpack.c.h.b16 %v250
    %v774 = vunpack.c.l.b16 %v251
    %v775 = vunpack.c.h.b16 %v251
    %v776 = vunpack.c.l.b16 %v252
    %v777 = vunpack.c.h.b16 %v252
    %v778 = vunpack.c.l.b16 %v253
    %v779 = vunpack.c.h.b16 %v253
    %v780 = vunpack.c.l.b16 %v254
    %v781 = vunpack.c.h.b16 %v254
    %v782 = vunpack.c.l.b16 %v255
    %v783 = vunpack.c.h.b16 %v255
    %v784 = vunpack.c.l.b16 %v256
    %v785 = vunpack.c.h.b16 %v256
    %v786 = vunpack.c.l.b16 %v257
    %v787 = vunpack.c.h.b16 %v257
    %v788 = vunpack.c.l.b16 %v258
    %v789 = vunpack.c.h.b16 %v258
    %v790 = vunpack.c.l.b16 %v259
    %v791 = vunpack.c.h.b16 %v259
    %v792 = vunpack.c.l.b16 %v260
    %v793 = vunpack.c.h.b16 %v260
    %v794 = vunpack.c.l.b16 %v261
    %v795 = vunpack.c.h.b16 %v261
    %v796 = vunpack.c.l.b16 %v262
    %v797 = vunpack.c.h.b16 %v262
    %v798 = vunpack.c.l.b16 %v263
    %v799 = vunpack.c.h.b16 %v263
    %v800 = vunpack.c.l.b16 %v264
    %v801 = vunpack.c.h.b16 %v264
    %v802 = vunpack.c.l.b16 %v265
    %v803 = vunpack.c.h.b16 %v265
    %v804 = vunpack.c.l.b16 %v266
    %v805 = vunpack.c.h.b16 %v266
    %v806 = vunpack.c.l.b16 %v267
    %v807 = vunpack.c.h.b16 %v267
    %v808 = vunpack.c.l.b16 %v268
    %v809 = vunpack.c.h.b16 %v268
    %v810 = vunpack.c.l.b16 %v269
    %v811 = vunpack.c.h.b16 %v269
    %v812 = vunpack.c.l.b16 %v270
    %v813 = vunpack.c.h.b16 %v270
    %v814 = vunpack.c.l.b16 %v271
    %v815 = vunpack.c.h.b16 %v271
    %v816 = vunpack.c.l.b16 %v272
    %v817 = vunpack.c.h.b16 %v272
    %v818 = vunpack.c.l.b16 %v273
    %v819 = vunpack.c.h.b16 %v273
    %v820 = vunpack.c.l.b16 %v274
    %v821 = vunpack.c.h.b16 %v274
    %v822 = vunpack.c.l.b16 %v275
    %v823 = vunpack.c.h.b16 %v275
    %v824 = vunpack.c.l.b16 %v276
    %v825 = vunpack.c.h.b16 %v276
    %v826 = vunpack.c.l.b16 %v277
    %v827 = vunpack.c.h.b16 %v277
    %v828 = vunpack.c.l.b16 %v278
    %v829 = vunpack.c.h.b16 %v278
    %v830 = vunpack.c.l.b16 %v279
    %v831 = vunpack.c.h.b16 %v279
    %v832 = vunpack.c.l.b16 %v280
    %v833 = vunpack.c.h.b16 %v280
    %v834 = vunpack.c.l.b16 %v281
    %v835 = vunpack.c.h.b16 %v281
    %v836 = vunpack.c.l.b16 %v282
    %v837 = vunpack.c.h.b16 %v282
    %v838 = vunpack.c.l.b16 %v283
    %v839 = vunpack.c.h.b16 %v283
    %v840 = vunpack.c.l.b16 %v284
    %v841 = vunpack.c.h.b16 %v284
    %v842 = vunpack.c.l.b16 %v285
    %v843 = vunpack.c.h.b16 %v285
    %v844 = vunpack.c.l.b16 %v286
    %v845 = vunpack.c.h.b16 %v286
    %v846 = vunpack.c.l.b16 %v287
    %v847 = vunpack.c.h.b16 %v287
    %v848 = vunpack.c.l.b16 %v288
    %v849 = vunpack.c.h.b16 %v288
    %v850 = vunpack.c.l.b16 %v289
    %v851 = vunpack.c.h.b16 %v289
    %v852 = vunpack.c.l.b16 %v290
    %v853 = vunpack.c.h.b16 %v290
    %v854 = vunpack.c.l.b16 %v291
    %v855 = vunpack.c.h.b16 %v291
    %v856 = vunpack.c.l.b16 %v292
    %v857 = vunpack.c.h.b16 %v292
    %v858 = vunpack.c.l.b16 %v293
    %v859 = vunpack.c.h.b16 %v293
    %v860 = vunpack.c.l.b16 %v294
    %v861 = vunpack.c.h.b16 %v294
    %v862 = vunpack.c.l.b16 %v295
    %v863 = vunpack.c.h.b16 %v295
    %v864 = vunpack.c.l.b16 %v296
    %v865 = vunpack.c.h.b16 %v296
    %v866 = vunpack.c.l.b16 %v297
    %v867 = vunpack.c.h.b16 %v297
    %v868 = vunpack.c.l.b16 %v298
    %v869 = vunpack.c.h.b16 %v298
    %v870 = vunpack.c.l.b16 %v299
    %v871 = vunpack.c.h.b16 %v299
    %v872 = vunpack.c.l.b16 %v300
    %v873 = vunpack.c.h.b16 %v300
    %v874 = vunpack.c.l.b16 %v301
    %v875 = vunpack.c.h.b16 %v301
    %v876 = vunpack.c.l.b16 %v302
    %v877 = vunpack.c.h.b16 %v302
    %v878 = vunpack.c.l.b16 %v303
    %v879 = vunpack.c.h.b16 %v303
    %v880 = vunpack.c.l.b16 %v304
    %v881 = vunpack.c.h.b16 %v304
    %v882 = vunpack.c.l.b16 %v305
    %v883 = vunpack.c.h.b16 %v305
    %v884 = vunpack.c.l.b16 %v306
    %v885 = vunpack.c.h.b16 %v306
    %v886 = vunpack.c.l.b16 %v307
    %v887 = vunpack.c.h.b16 %v307
    %v888 = vunpack.c.l.b16 %v308
    %v889 = vunpack.c.h.b16 %v308
    %v890 = vunpack.c.l.b16 %v309
    %v891 = vunpack.c.h.b16 %v309
    %v892 = vunpack.c.l.b16 %v310
    %v893 = vunpack.c.h.b16 %v310
    %v894 = vunpack.c.l.b16 %v311
    %v895 = vunpack.c.h.b16 %v311
    %v896 = vunpack.c.l.b16 %v312
    %v897 = vunpack.c.h.b16 %v312
    %v898 = vunpack.c.l.b16 %v313
    %v899 = vunpack.c.h.b16 %v313
    %v900 = vunpack.c.l.b16 %v314
    %v901 = vunpack.c.h.b16 %v314
    %v902 = vunpack.c.l.b16 %v315
    %v903 = vunpack.c.h.b16 %v315
    %v904 = vunpack.c.l.b16 %v316
    %v905 = vunpack.c.h.b16 %v316
    %v906 = vunpack.c.l.b16 %v317
    %v907 = vunpack.c.h.b16 %v317
    %v908 = vunpack.c.l.b16 %v318
    %v909 = vunpack.c.h.b16 %v318
    %v910 = vunpack.c.l.b16 %v319
    %v911 = vunpack.c.h.b16 %v319
    %v912 = vunpack.c.l.b16 %v320
    %v913 = vunpack.c.h.b16 %v320
    %v914 = vunpack.c.l.b16 %v321
    %v915 = vunpack.c.h.b16 %v321
    %v916 = vunpack.c.l.b16 %v322
    %v917 = vunpack.c.h.b16 %v322
    %v918 = vunpack.c.l.b16 %v323
    %v919 = vunpack.c.h.b16 %v323
    %v920 = vunpack.c.l.b16 %v324
    %v921 = vunpack.c.h.b16 %v324
    %v922 = vunpack.c.l.b16 %v325
    %v923 = vunpack.c.h.b16 %v325
    %v924 = vpack.c.b16 %v536, %v532
    %v925 = vpack.c.b16 %v537, %v533
    %v926 = vpack.c.b16 %v538, %v534
    %v927 = vpack.c.b16 %v539, %v535
    %v928 = vpack.c.b16 %v544, %v540
    %v929 = vpack.c.b16 %v545, %v541
    %v930 = vpack.c.b16 %v546, %v542
    %v931 = vpack.c.b16 %v547, %v543
    %v932 = vpack.c.b16 %v552, %v548
    %v933 = vpack.c.b16 %v553, %v549
    %v934 = vpack.c.b16 %v554, %v550
    %v935 = vpack.c.b16 %v555, %v551
    %v936 = vpack.c.b16 %v560, %v556
    %v937 = vpack.c.b16 %v561, %v557
    %v938 = vpack.c.b16 %v562, %v558
    %v939 = vpack.c.b16 %v563, %v559
    %v940 = vpack.c.b16 %v568, %v564
    %v941 = vpack.c.b16 %v569, %v565
    %v942 = vpack.c.b16 %v570, %v566
    %v943 = vpack.c.b16 %v571, %v567
    %v944 = vpack.c.b16 %v576, %v572
    %v945 = vpack.c.b16 %v577, %v573
    %v946 = vpack.c.b16 %v578, %v574
    %v947 = vpack.c.b16 %v579, %v575
    %v948 = vpack.c.b16 %v584, %v580
    %v949 = vpack.c.b16 %v585, %v581
    %v950 = vpack.c.b16 %v586, %v582
    %v951 = vpack.c.b16 %v587, %v583
    %v952 = vpack.c.b16 %v592, %v588
    %v953 = vpack.c.b16 %v593, %v589
    %v954 = vpack.c.b16 %v594, %v590
    %v955 = vpack.c.b16 %v595, %v591
    %v956 = vpack.c.b16 %v600, %v596
    %v957 = vpack.c.b16 %v601, %v597
    %v958 = vpack.c.b16 %v602, %v598
    %v959 = vpack.c.b16 %v603, %v599
    %v960 = vpack.c.b16 %v608, %v604
    %v961 = vpack.c.b16 %v609, %v605
    %v962 = vpack.c.b16 %v610, %v606
    %v963 = vpack.c.b16 %v611, %v607
    %v964 = vpack.c.b16 %v616, %v612
    %v965 = vpack.c.b16 %v617, %v613
    %v966 = vpack.c.b16 %v618, %v614
    %v967 = vpack.c.b16 %v619, %v615
    %v968 = vpack.c.b16 %v624, %v620
    %v969 = vpack.c.b16 %v625, %v621
    %v970 = vpack.c.b16 %v626, %v622
    %v971 = vpack.c.b16 %v627, %v623
    %v972 = vpack.c.b16 %v632, %v628
    %v973 = vpack.c.b16 %v633, %v629
    %v974 = vpack.c.b16 %v634, %v630
    %v975 = vpack.c.b16 %v635, %v631
    %v976 = vpack.c.b16 %v640, %v636
    %v977 = vpack.c.b16 %v641, %v637
    %v978 = vpack.c.b16 %v642, %v638
    %v979 = vpack.c.b16 %v643, %v639
    %v980 = vpack.c.b16 %v648, %v644
    %v981 = vpack.c.b16 %v649, %v645
    %v982 = vpack.c.b16 %v650, %v646
    %v983 = vpack.c.b16 %v651, %v647
    %v984 = vpack.c.b16 %v656, %v652
    %v985 = vpack.c.b16 %v657, %v653
    %v986 = vpack.c.b16 %v658, %v654
    %v987 = vpack.c.b16 %v659, %v655
    %v988 = vpack.c.b16 %v664, %v660
    %v989 = vpack.c.b16 %v665, %v661
    %v990 = vpack.c.b16 %v666, %v662
    %v991 = vpack.c.b16 %v667, %v663
    %v992 = vpack.c.b16 %v672, %v668
    %v993 = vpack.c.b16 %v673, %v669
    %v994 = vpack.c.b16 %v674, %v670
    %v995 = vpack.c.b16 %v675, %v671
    %v996 = vpack.c.b16 %v680, %v676
    %v997 = vpack.c.b16 %v681, %v677
    %v998 = vpack.c.b16 %v682, %v678
    %v999 = vpack.c.b16 %v683, %v679
    %v1000 = vpack.c.b16 %v688, %v684
    %v1001 = vpack.c.b16 %v689, %v685
    %v1002 = vpack.c.b16 %v690, %v686
    %v1003 = vpack.c.b16 %v691, %v687
    %v1004 = vpack.c.b16 %v696, %v692
    %v1005 = vpack.c.b16 %v697, %v693
    %v1006 = vpack.c.b16 %v698, %v694
    %v1007 = vpack.c.b16 %v699, %v695
    %v1008 = vpack.c.b16 %v704, %v700
    %v1009 = vpack.c.b16 %v705, %v701
    %v1010 = vpack.c.b16 %v706, %v702
    %v1011 = vpack.c.b16 %v707, %v703
    %v1012 = vpack.c.b16 %v712, %v708
    %v1013 = vpack.c.b16 %v713, %v709
    %v1014 = vpack.c.b16 %v714, %v710
    %v1015 = vpack.c.b16 %v715, %v711
    %v1016 = vpack.c.b16 %v720, %v716
    %v1017 = vpack.c.b16 %v721, %v717
    %v1018 = vpack.c.b16 %v722, %v718
    %v1019 = vpack.c.b16 %v723, %v719
    %v1020 = vpack.c.b16 %v728, %v724
    %v1021 = vpack.c.b16 %v729, %v725
    %v1022 = vpack.c.b16 %v730, %v726
    %v1023 = vpack.c.b16 %v731, %v727
    %v1024 = vpack.c.b16 %v736, %v732
    %v1025 = vpack.c.b16 %v737, %v733
    %v1026 = vpack.c.b16 %v738, %v734
    %v1027 = vpack.c.b16 %v739, %v735
    %v1028 = vpack.c.b16 %v744, %v740
    %v1029 = vpack.c.b16 %v745, %v741
    %v1030 = vpack.c.b16 %v746, %v742
    %v1031 = vpack.c.b16 %v747, %v743
    %v1032 = vpack.c.b16 %v752, %v748
    %v1033 = vpack.c.b16 %v753, %v749
    %v1034 = vpack.c.b16 %v754, %v750
    %v1035 = vpack.c.b16 %v755, %v751
    %v1036 = vpack.c.b16 %v760, %v756
    %v1037 = vpack.c.b16 %v761, %v757
    %v1038 = vpack.c.b16 %v762, %v758
    %v1039 = vpack.c.b16 %v763, %v759
    %v1040 = vpack.c.b16 %v768, %v764
    %v1041 = vpack.c.b16 %v769, %v765
    %v1042 = vpack.c.b16 %v770, %v766
    %v1043 = vpack.c.b16 %v771, %v767
    %v1044 = vpack.c.b16 %v776, %v772
    %v1045 = vpack.c.b16 %v777, %v773
    %v1046 = vpack.c.b16 %v778, %v774
    %v1047 = vpack.c.b16 %v779, %v775
    %v1048 = vpack.c.b16 %v784, %v780
    %v1049 = vpack.c.b16 %v785, %v781
    %v1050 = vpack.c.b16 %v786, %v782
    %v1051 = vpack.c.b16 %v787, %v783
    %v1052 = vpack.c.b16 %v792, %v788
    %v1053 = vpack.c.b16 %v793, %v789
    %v1054 = vpack.c.b16 %v794, %v790
    %v1055 = vpack.c.b16 %v795, %v791
    %v1056 = vpack.c.b16 %v800, %v796
    %v1057 = vpack.c.b16 %v801, %v797
    %v1058 = vpack.c.b16 %v802, %v798
    %v1059 = vpack.c.b16 %v803, %v799
    %v1060 = vpack.c.b16 %v808, %v804
    %v1061 = vpack.c.b16 %v809, %v805
    %v1062 = vpack.c.b16 %v810, %v806
    %v1063 = vpack.c.b16 %v811, %v807
    %v1064 = vpack.c.b16 %v816, %v812
    %v1065 = vpack.c.b16 %v817, %v813
    %v1066 = vpack.c.b16 %v818, %v814
    %v1067 = vpack.c.b16 %v819, %v815
    %v1068 = vpack.c.b16 %v824, %v820
    %v1069 = vpack.c.b16 %v825, %v821
    %v1070 = vpack.c.b16 %v826, %v822
    %v1071 = vpack.c.b16 %v827, %v823
    %v1072 = vpack.c.b16 %v832, %v828
    %v1073 = vpack.c.b16 %v833, %v829
    %v1074 = vpack.c.b16 %v834, %v830
    %v1075 = vpack.c.b16 %v835, %v831
    %v1076 = vpack.c.b16 %v840, %v836
    %v1077 = vpack.c.b16 %v841, %v837
    %v1078 = vpack.c.b16 %v842, %v838
    %v1079 = vpack.c.b16 %v843, %v839
    %v1080 = vpack.c.b16 %v848, %v844
    %v1081 = vpack.c.b16 %v849, %v845
    %v1082 = vpack.c.b16 %v850, %v846
    %v1083 = vpack.c.b16 %v851, %v847
    %v1084 = vpack.c.b16 %v856, %v852
    %v1085 = vpack.c.b16 %v857, %v853
    %v1086 = vpack.c.b16 %v858, %v854
    %v1087 = vpack.c.b16 %v859, %v855
    %v1088 = vpack.c.b16 %v864, %v860
    %v1089 = vpack.c.b16 %v865, %v861
    %v1090 = vpack.c.b16 %v866, %v862
    %v1091 = vpack.c.b16 %v867, %v863
    %v1092 = vpack.c.b16 %v872, %v868
    %v1093 = vpack.c.b16 %v873, %v869
    %v1094 = vpack.c.b16 %v874, %v870
    %v1095 = vpack.c.b16 %v875, %v871
    %v1096 = vpack.c.b16 %v880, %v876
    %v1097 = vpack.c.b16 %v881, %v877
    %v1098 = vpack.c.b16 %v882, %v878
    %v1099 = vpack.c.b16 %v883, %v879
    %v1100 = vpack.c.b16 %v888, %v884
    %v1101 = vpack.c.b16 %v889, %v885
    %v1102 = vpack.c.b16 %v890, %v886
    %v1103 = vpack.c.b16 %v891, %v887
    %v1104 = vpack.c.b16 %v896, %v892
    %v1105 = vpack.c.b16 %v897, %v893
    %v1106 = vpack.c.b16 %v898, %v894
    %v1107 = vpack.c.b16 %v899, %v895
    %v1108 = vpack.c.b16 %v904, %v900
    %v1109 = vpack.c.b16 %v905, %v901
    %v1110 = vpack.c.b16 %v906, %v902
    %v1111 = vpack.c.b16 %v907, %v903
    %v1112 = vpack.c.b16 %v912, %v908
    %v1113 = vpack.c.b16 %v913, %v909
    %v1114 = vpack.c.b16 %v914, %v910
    %v1115 = vpack.c.b16 %v915, %v911
    %v1116 = vpack.c.b16 %v920, %v916
    %v1117 = vpack.c.b16 %v921, %v917
    %v1118 = vpack.c.b16 %v922, %v918
    %v1119 = vpack.c.b16 %v923, %v919
    %vm1316 = vcmask 130048
    %v1318 = vsel %vm1316, %v129, 0
    %1320 = vmatpush.bf16.msra.mxu0 %v952
    %1321 = vmatpush.bf16.msra.mxu0 %v948
    %1322 = vmatpush.bf16.msra.mxu0 %v944
    %1323 = vmatpush.bf16.msra.mxu0 %v940
    %1324 = vmatpush.bf16.msra.mxu0 %v936
    %1325 = vmatpush.bf16.msra.mxu0 %v932
    %1326 = vmatpush.bf16.msra.mxu0 %v928
    %1327 = vmatpush.bf16.msra.mxu0 %v924
    %1328 = vmatmul.bf16.gmra.mxu0 %v123
    %v1329 = vpop.f32.mrf.mxu0
    %v1330 = vadd.f32 %v328, %v1329
    %v1331 = vpop.f32.mrf.mxu0
    %1332 = vdwg.mxu0
    %1333 = vmatpush.bf16.msra.mxu0 %v984
    %1334 = vmatpush.bf16.msra.mxu0 %v980
    %1335 = vmatpush.bf16.msra.mxu0 %v976
    %1336 = vmatpush.bf16.msra.mxu0 %v972
    %1337 = vmatpush.bf16.msra.mxu0 %v968
    %1338 = vmatpush.bf16.msra.mxu0 %v964
    %1339 = vmatpush.bf16.msra.mxu0 %v960
    %1340 = vmatpush.bf16.msra.mxu0 %v956
    %1341 = vmatmul.bf16.gmra.mxu0 %v124
    %v1342 = vpop.f32.mrf.mxu0
    %v1343 = vadd.f32 %v1330, %v1342
    %v1344 = vpop.f32.mrf.mxu0
    %1345 = vdwg.mxu0
    %1346 = vmatpush.bf16.msra.mxu0 %v1016
    %1347 = vmatpush.bf16.msra.mxu0 %v1012
    %1348 = vmatpush.bf16.msra.mxu0 %v1008
    %1349 = vmatpush.bf16.msra.mxu0 %v1004
    %1350 = vmatpush.bf16.msra.mxu0 %v1000
    %1351 = vmatpush.bf16.msra.mxu0 %v996
    %1352 = vmatpush.bf16.msra.mxu0 %v992
    %1353 = vmatpush.bf16.msra.mxu0 %v988
    %1354 = vmatmul.bf16.gmra.mxu0 %v125
    %v1355 = vpop.f32.mrf.mxu0
    %v1356 = vadd.f32 %v1343, %v1355
    %v1357 = vpop.f32.mrf.mxu0
    %1358 = vdwg.mxu0
    %1359 = vmatpush.bf16.msra.mxu0 %v1048
    %1360 = vmatpush.bf16.msra.mxu0 %v1044
    %1361 = vmatpush.bf16.msra.mxu0 %v1040
    %1362 = vmatpush.bf16.msra.mxu0 %v1036
    %1363 = vmatpush.bf16.msra.mxu0 %v1032
    %1364 = vmatpush.bf16.msra.mxu0 %v1028
    %1365 = vmatpush.bf16.msra.mxu0 %v1024
    %1366 = vmatpush.bf16.msra.mxu0 %v1020
    %1367 = vmatmul.bf16.gmra.mxu0 %v126
    %v1368 = vpop.f32.mrf.mxu0
    %v1369 = vadd.f32 %v1356, %v1368
    %v1370 = vpop.f32.mrf.mxu0
    %1371 = vdwg.mxu0
    %1372 = vmatpush.bf16.msra.mxu0 %v1080
    %1373 = vmatpush.bf16.msra.mxu0 %v1076
    %1374 = vmatpush.bf16.msra.mxu0 %v1072
    %1375 = vmatpush.bf16.msra.mxu0 %v1068
    %1376 = vmatpush.bf16.msra.mxu0 %v1064
    %1377 = vmatpush.bf16.msra.mxu0 %v1060
    %1378 = vmatpush.bf16.msra.mxu0 %v1056
    %1379 = vmatpush.bf16.msra.mxu0 %v1052
    %1380 = vmatmul.bf16.gmra.mxu0 %v127
    %v1381 = vpop.f32.mrf.mxu0
    %v1382 = vadd.f32 %v1369, %v1381
    %v1383 = vpop.f32.mrf.mxu0
    %1384 = vdwg.mxu0
    %1385 = vmatpush.bf16.msra.mxu0 %v1112
    %1386 = vmatpush.bf16.msra.mxu0 %v1108
    %1387 = vmatpush.bf16.msra.mxu0 %v1104
    %1388 = vmatpush.bf16.msra.mxu0 %v1100
    %1389 = vmatpush.bf16.msra.mxu0 %v1096
    %1390 = vmatpush.bf16.msra.mxu0 %v1092
    %1391 = vmatpush.bf16.msra.mxu0 %v1088
    %1392 = vmatpush.bf16.msra.mxu0 %v1084
    %1393 = vmatmul.bf16.gmra.mxu0 %v128
    %v1394 = vpop.f32.mrf.mxu0
    %v1395 = vadd.f32 %v1382, %v1394
    %v1396 = vpop.f32.mrf.mxu0
    %1397 = vdwg.mxu0
    %1398 = vmatpush.bf16.msra.mxu0 0
    %1399 = vmatpush.bf16.msra.mxu0 0
    %1400 = vmatpush.bf16.msra.mxu0 0
    %1401 = vmatpush.bf16.msra.mxu0 0
    %1402 = vmatpush.bf16.msra.mxu0 0
    %1403 = vmatpush.bf16.msra.mxu0 0
    %1404 = vmatpush.bf16.msra.mxu0 0
    %1405 = vmatpush.bf16.msra.mxu0 %v1116
    %1406 = vmatmul.bf16.gmra.mxu0 %v1318
    %v1407 = vpop.f32.mrf.mxu0
    %v1408 = vadd.f32 %v1395, %v1407
    %v1409 = vpop.f32.mrf.mxu0
    %1410 = vdwg.mxu0
    %1411 = vmatpush.bf16.msra.mxu0 %v953
    %1412 = vmatpush.bf16.msra.mxu0 %v949
    %1413 = vmatpush.bf16.msra.mxu0 %v945
    %1414 = vmatpush.bf16.msra.mxu0 %v941
    %1415 = vmatpush.bf16.msra.mxu0 %v937
    %1416 = vmatpush.bf16.msra.mxu0 %v933
    %1417 = vmatpush.bf16.msra.mxu0 %v929
    %1418 = vmatpush.bf16.msra.mxu0 %v925
    %1419 = vmatmul.bf16.gmra.mxu0 %v123
    %v1420 = vpop.f32.mrf.mxu0
    %v1421 = vadd.f32 %v329, %v1420
    %v1422 = vpop.f32.mrf.mxu0
    %1423 = vdwg.mxu0
    %1424 = vmatpush.bf16.msra.mxu0 %v985
    %1425 = vmatpush.bf16.msra.mxu0 %v981
    %1426 = vmatpush.bf16.msra.mxu0 %v977
    %1427 = vmatpush.bf16.msra.mxu0 %v973
    %1428 = vmatpush.bf16.msra.mxu0 %v969
    %1429 = vmatpush.bf16.msra.mxu0 %v965
    %1430 = vmatpush.bf16.msra.mxu0 %v961
    %1431 = vmatpush.bf16.msra.mxu0 %v957
    %1432 = vmatmul.bf16.gmra.mxu0 %v124
    %v1433 = vpop.f32.mrf.mxu0
    %v1434 = vadd.f32 %v1421, %v1433
    %v1435 = vpop.f32.mrf.mxu0
    %1436 = vdwg.mxu0
    %1437 = vmatpush.bf16.msra.mxu0 %v1017
    %1438 = vmatpush.bf16.msra.mxu0 %v1013
    %1439 = vmatpush.bf16.msra.mxu0 %v1009
    %1440 = vmatpush.bf16.msra.mxu0 %v1005
    %1441 = vmatpush.bf16.msra.mxu0 %v1001
    %1442 = vmatpush.bf16.msra.mxu0 %v997
    %1443 = vmatpush.bf16.msra.mxu0 %v993
    %1444 = vmatpush.bf16.msra.mxu0 %v989
    %1445 = vmatmul.bf16.gmra.mxu0 %v125
    %v1446 = vpop.f32.mrf.mxu0
    %v1447 = vadd.f32 %v1434, %v1446
    %v1448 = vpop.f32.mrf.mxu0
    %1449 = vdwg.mxu0
    %1450 = vmatpush.bf16.msra.mxu0 %v1049
    %1451 = vmatpush.bf16.msra.mxu0 %v1045
    %1452 = vmatpush.bf16.msra.mxu0 %v1041
    %1453 = vmatpush.bf16.msra.mxu0 %v1037
    %1454 = vmatpush.bf16.msra.mxu0 %v1033
    %1455 = vmatpush.bf16.msra.mxu0 %v1029
    %1456 = vmatpush.bf16.msra.mxu0 %v1025
    %1457 = vmatpush.bf16.msra.mxu0 %v1021
    %1458 = vmatmul.bf16.gmra.mxu0 %v126
    %v1459 = vpop.f32.mrf.mxu0
    %v1460 = vadd.f32 %v1447, %v1459
    %v1461 = vpop.f32.mrf.mxu0
    %1462 = vdwg.mxu0
    %1463 = vmatpush.bf16.msra.mxu0 %v1081
    %1464 = vmatpush.bf16.msra.mxu0 %v1077
    %1465 = vmatpush.bf16.msra.mxu0 %v1073
    %1466 = vmatpush.bf16.msra.mxu0 %v1069
    %1467 = vmatpush.bf16.msra.mxu0 %v1065
    %1468 = vmatpush.bf16.msra.mxu0 %v1061
    %1469 = vmatpush.bf16.msra.mxu0 %v1057
    %1470 = vmatpush.bf16.msra.mxu0 %v1053
    %1471 = vmatmul.bf16.gmra.mxu0 %v127
    %v1472 = vpop.f32.mrf.mxu0
    %v1473 = vadd.f32 %v1460, %v1472
    %v1474 = vpop.f32.mrf.mxu0
    %1475 = vdwg.mxu0
    %1476 = vmatpush.bf16.msra.mxu0 %v1113
    %1477 = vmatpush.bf16.msra.mxu0 %v1109
    %1478 = vmatpush.bf16.msra.mxu0 %v1105
    %1479 = vmatpush.bf16.msra.mxu0 %v1101
    %1480 = vmatpush.bf16.msra.mxu0 %v1097
    %1481 = vmatpush.bf16.msra.mxu0 %v1093
    %1482 = vmatpush.bf16.msra.mxu0 %v1089
    %1483 = vmatpush.bf16.msra.mxu0 %v1085
    %1484 = vmatmul.bf16.gmra.mxu0 %v128
    %v1485 = vpop.f32.mrf.mxu0
    %v1486 = vadd.f32 %v1473, %v1485
    %v1487 = vpop.f32.mrf.mxu0
    %1488 = vdwg.mxu0
    %1489 = vmatpush.bf16.msra.mxu0 0
    %1490 = vmatpush.bf16.msra.mxu0 0
    %1491 = vmatpush.bf16.msra.mxu0 0
    %1492 = vmatpush.bf16.msra.mxu0 0
    %1493 = vmatpush.bf16.msra.mxu0 0
    %1494 = vmatpush.bf16.msra.mxu0 0
    %1495 = vmatpush.bf16.msra.mxu0 0
    %1496 = vmatpush.bf16.msra.mxu0 %v1117
    %1497 = vmatmul.bf16.gmra.mxu0 %v1318
    %v1498 = vpop.f32.mrf.mxu0
    %v1499 = vadd.f32 %v1486, %v1498
    %v1500 = vpop.f32.mrf.mxu0
    %1501 = vdwg.mxu0
    %1502 = vmatpush.bf16.msra.mxu0 %v954
    %1503 = vmatpush.bf16.msra.mxu0 %v950
    %1504 = vmatpush.bf16.msra.mxu0 %v946
    %1505 = vmatpush.bf16.msra.mxu0 %v942
    %1506 = vmatpush.bf16.msra.mxu0 %v938
    %1507 = vmatpush.bf16.msra.mxu0 %v934
    %1508 = vmatpush.bf16.msra.mxu0 %v930
    %1509 = vmatpush.bf16.msra.mxu0 %v926
    %1510 = vmatmul.bf16.gmra.mxu0 %v123
    %v1511 = vpop.f32.mrf.mxu0
    %v1512 = vadd.f32 %v330, %v1511
    %v1513 = vpop.f32.mrf.mxu0
    %1514 = vdwg.mxu0
    %1515 = vmatpush.bf16.msra.mxu0 %v986
    %1516 = vmatpush.bf16.msra.mxu0 %v982
    %1517 = vmatpush.bf16.msra.mxu0 %v978
    %1518 = vmatpush.bf16.msra.mxu0 %v974
    %1519 = vmatpush.bf16.msra.mxu0 %v970
    %1520 = vmatpush.bf16.msra.mxu0 %v966
    %1521 = vmatpush.bf16.msra.mxu0 %v962
    %1522 = vmatpush.bf16.msra.mxu0 %v958
    %1523 = vmatmul.bf16.gmra.mxu0 %v124
    %v1524 = vpop.f32.mrf.mxu0
    %v1525 = vadd.f32 %v1512, %v1524
    %v1526 = vpop.f32.mrf.mxu0
    %1527 = vdwg.mxu0
    %1528 = vmatpush.bf16.msra.mxu0 %v1018
    %1529 = vmatpush.bf16.msra.mxu0 %v1014
    %1530 = vmatpush.bf16.msra.mxu0 %v1010
    %1531 = vmatpush.bf16.msra.mxu0 %v1006
    %1532 = vmatpush.bf16.msra.mxu0 %v1002
    %1533 = vmatpush.bf16.msra.mxu0 %v998
    %1534 = vmatpush.bf16.msra.mxu0 %v994
    %1535 = vmatpush.bf16.msra.mxu0 %v990
    %1536 = vmatmul.bf16.gmra.mxu0 %v125
    %v1537 = vpop.f32.mrf.mxu0
    %v1538 = vadd.f32 %v1525, %v1537
    %v1539 = vpop.f32.mrf.mxu0
    %1540 = vdwg.mxu0
    %1541 = vmatpush.bf16.msra.mxu0 %v1050
    %1542 = vmatpush.bf16.msra.mxu0 %v1046
    %1543 = vmatpush.bf16.msra.mxu0 %v1042
    %1544 = vmatpush.bf16.msra.mxu0 %v1038
    %1545 = vmatpush.bf16.msra.mxu0 %v1034
    %1546 = vmatpush.bf16.msra.mxu0 %v1030
    %1547 = vmatpush.bf16.msra.mxu0 %v1026
    %1548 = vmatpush.bf16.msra.mxu0 %v1022
    %1549 = vmatmul.bf16.gmra.mxu0 %v126
    %v1550 = vpop.f32.mrf.mxu0
    %v1551 = vadd.f32 %v1538, %v1550
    %v1552 = vpop.f32.mrf.mxu0
    %1553 = vdwg.mxu0
    %1554 = vmatpush.bf16.msra.mxu0 %v1082
    %1555 = vmatpush.bf16.msra.mxu0 %v1078
    %1556 = vmatpush.bf16.msra.mxu0 %v1074
    %1557 = vmatpush.bf16.msra.mxu0 %v1070
    %1558 = vmatpush.bf16.msra.mxu0 %v1066
    %1559 = vmatpush.bf16.msra.mxu0 %v1062
    %1560 = vmatpush.bf16.msra.mxu0 %v1058
    %1561 = vmatpush.bf16.msra.mxu0 %v1054
    %1562 = vmatmul.bf16.gmra.mxu0 %v127
    %v1563 = vpop.f32.mrf.mxu0
    %v1564 = vadd.f32 %v1551, %v1563
    %v1565 = vpop.f32.mrf.mxu0
    %1566 = vdwg.mxu0
    %1567 = vmatpush.bf16.msra.mxu0 %v1114
    %1568 = vmatpush.bf16.msra.mxu0 %v1110
    %1569 = vmatpush.bf16.msra.mxu0 %v1106
    %1570 = vmatpush.bf16.msra.mxu0 %v1102
    %1571 = vmatpush.bf16.msra.mxu0 %v1098
    %1572 = vmatpush.bf16.msra.mxu0 %v1094
    %1573 = vmatpush.bf16.msra.mxu0 %v1090
    %1574 = vmatpush.bf16.msra.mxu0 %v1086
    %1575 = vmatmul.bf16.gmra.mxu0 %v128
    %v1576 = vpop.f32.mrf.mxu0
    %v1577 = vadd.f32 %v1564, %v1576
    %v1578 = vpop.f32.mrf.mxu0
    %1579 = vdwg.mxu0
    %1580 = vmatpush.bf16.msra.mxu0 0
    %1581 = vmatpush.bf16.msra.mxu0 0
    %1582 = vmatpush.bf16.msra.mxu0 0
    %1583 = vmatpush.bf16.msra.mxu0 0
    %1584 = vmatpush.bf16.msra.mxu0 0
    %1585 = vmatpush.bf16.msra.mxu0 0
    %1586 = vmatpush.bf16.msra.mxu0 0
    %1587 = vmatpush.bf16.msra.mxu0 %v1118
    %1588 = vmatmul.bf16.gmra.mxu0 %v1318
    %v1589 = vpop.f32.mrf.mxu0
    %v1590 = vadd.f32 %v1577, %v1589
    %v1591 = vpop.f32.mrf.mxu0
    %1592 = vdwg.mxu0
    %1593 = vmatpush.bf16.msra.mxu0 %v955
    %1594 = vmatpush.bf16.msra.mxu0 %v951
    %1595 = vmatpush.bf16.msra.mxu0 %v947
    %1596 = vmatpush.bf16.msra.mxu0 %v943
    %1597 = vmatpush.bf16.msra.mxu0 %v939
    %1598 = vmatpush.bf16.msra.mxu0 %v935
    %1599 = vmatpush.bf16.msra.mxu0 %v931
    %1600 = vmatpush.bf16.msra.mxu0 %v927
    %1601 = vmatmul.bf16.gmra.mxu0 %v123
    %v1602 = vpop.f32.mrf.mxu0
    %v1603 = vadd.f32 %v331, %v1602
    %v1604 = vpop.f32.mrf.mxu0
    %1605 = vdwg.mxu0
    %1606 = vmatpush.bf16.msra.mxu0 %v987
    %1607 = vmatpush.bf16.msra.mxu0 %v983
    %1608 = vmatpush.bf16.msra.mxu0 %v979
    %1609 = vmatpush.bf16.msra.mxu0 %v975
    %1610 = vmatpush.bf16.msra.mxu0 %v971
    %1611 = vmatpush.bf16.msra.mxu0 %v967
    %1612 = vmatpush.bf16.msra.mxu0 %v963
    %1613 = vmatpush.bf16.msra.mxu0 %v959
    %1614 = vmatmul.bf16.gmra.mxu0 %v124
    %v1615 = vpop.f32.mrf.mxu0
    %v1616 = vadd.f32 %v1603, %v1615
    %v1617 = vpop.f32.mrf.mxu0
    %1618 = vdwg.mxu0
    %1619 = vmatpush.bf16.msra.mxu0 %v1019
    %1620 = vmatpush.bf16.msra.mxu0 %v1015
    %1621 = vmatpush.bf16.msra.mxu0 %v1011
    %1622 = vmatpush.bf16.msra.mxu0 %v1007
    %1623 = vmatpush.bf16.msra.mxu0 %v1003
    %1624 = vmatpush.bf16.msra.mxu0 %v999
    %1625 = vmatpush.bf16.msra.mxu0 %v995
    %1626 = vmatpush.bf16.msra.mxu0 %v991
    %1627 = vmatmul.bf16.gmra.mxu0 %v125
    %v1628 = vpop.f32.mrf.mxu0
    %v1629 = vadd.f32 %v1616, %v1628
    %v1630 = vpop.f32.mrf.mxu0
    %1631 = vdwg.mxu0
    %1632 = vmatpush.bf16.msra.mxu0 %v1051
    %1633 = vmatpush.bf16.msra.mxu0 %v1047
    %1634 = vmatpush.bf16.msra.mxu0 %v1043
    %1635 = vmatpush.bf16.msra.mxu0 %v1039
    %1636 = vmatpush.bf16.msra.mxu0 %v1035
    %1637 = vmatpush.bf16.msra.mxu0 %v1031
    %1638 = vmatpush.bf16.msra.mxu0 %v1027
    %1639 = vmatpush.bf16.msra.mxu0 %v1023
    %1640 = vmatmul.bf16.gmra.mxu0 %v126
    %v1641 = vpop.f32.mrf.mxu0
    %v1642 = vadd.f32 %v1629, %v1641
    %v1643 = vpop.f32.mrf.mxu0
    %1644 = vdwg.mxu0
    %1645 = vmatpush.bf16.msra.mxu0 %v1083
    %1646 = vmatpush.bf16.msra.mxu0 %v1079
    %1647 = vmatpush.bf16.msra.mxu0 %v1075
    %1648 = vmatpush.bf16.msra.mxu0 %v1071
    %1649 = vmatpush.bf16.msra.mxu0 %v1067
    %1650 = vmatpush.bf16.msra.mxu0 %v1063
    %1651 = vmatpush.bf16.msra.mxu0 %v1059
    %1652 = vmatpush.bf16.msra.mxu0 %v1055
    %1653 = vmatmul.bf16.gmra.mxu0 %v127
    %v1654 = vpop.f32.mrf.mxu0
    %v1655 = vadd.f32 %v1642, %v1654
    %v1656 = vpop.f32.mrf.mxu0
    %1657 = vdwg.mxu0
    %1658 = vmatpush.bf16.msra.mxu0 %v1115
    %1659 = vmatpush.bf16.msra.mxu0 %v1111
    %1660 = vmatpush.bf16.msra.mxu0 %v1107
    %1661 = vmatpush.bf16.msra.mxu0 %v1103
    %1662 = vmatpush.bf16.msra.mxu0 %v1099
    %1663 = vmatpush.bf16.msra.mxu0 %v1095
    %1664 = vmatpush.bf16.msra.mxu0 %v1091
    %1665 = vmatpush.bf16.msra.mxu0 %v1087
    %1666 = vmatmul.bf16.gmra.mxu0 %v128
    %v1667 = vpop.f32.mrf.mxu0
    %v1668 = vadd.f32 %v1655, %v1667
    %v1669 = vpop.f32.mrf.mxu0
    %1670 = vdwg.mxu0
    %1671 = vmatpush.bf16.msra.mxu0 0
    %1672 = vmatpush.bf16.msra.mxu0 0
    %1673 = vmatpush.bf16.msra.mxu0 0
    %1674 = vmatpush.bf16.msra.mxu0 0
    %1675 = vmatpush.bf16.msra.mxu0 0
    %1676 = vmatpush.bf16.msra.mxu0 0
    %1677 = vmatpush.bf16.msra.mxu0 0
    %1678 = vmatpush.bf16.msra.mxu0 %v1119
    %1679 = vmatmul.bf16.gmra.mxu0 %v1318
    %v1680 = vpop.f32.mrf.mxu0
    %v1681 = vadd.f32 %v1668, %v1680
    %v1682 = vpop.f32.mrf.mxu0
    %1683 = vdwg.mxu0
    %v1684 = vmax.f32 %v1408, 0.0
    %v1685 = vmax.f32 %v1499, 0.0
    %v1686 = vmax.f32 %v1590, 0.0
    %v1687 = vmax.f32 %v1681, 0.0
    %v1688 = vpack.c.bf16 %v1684, %v1684
    %v1689 = vpack.c.bf16 %v1685, %v1685
    %v1690 = vpack.c.bf16 %v1686, %v1686
    %v1691 = vpack.c.bf16 %v1687, %v1687
    %v1692 = vld [vmem:[#allocation8] sm:$0xff]
    %v1693 = vld [vmem:[#allocation8 + $0x8] sm:$0xff]
    %v1694 = vld [vmem:[#allocation8 + $0x10] sm:$0xff]
    %v1695 = vld [vmem:[#allocation8 + $0x18] sm:$0xff]
    %v1696 = vld [vmem:[#allocation8 + $0x20] sm:$0xff]
    %v1697 = vld [vmem:[#allocation8 + $0x28] sm:$0xff]
    %v1698 = vld [vmem:[#allocation8 + $0x30] sm:$0xff]
    %v1699 = vld [vmem:[#allocation8 + $0x38] sm:$0xff]
    %v1700 = vld [vmem:[#allocation8 + $0x40] sm:$0xff]
    %v1701 = vld [vmem:[#allocation8 + $0x48] sm:$0xff]
    %v1702 = vld [vmem:[#allocation8 + $0x50] sm:$0xff]
    %v1703 = vld [vmem:[#allocation8 + $0x58] sm:$0xff]
    %v1704 = vld [vmem:[#allocation8 + $0x60] sm:$0xff]
    %v1705 = vld [vmem:[#allocation8 + $0x68] sm:$0xff]
    %v1706 = vld [vmem:[#allocation8 + $0x70] sm:$0xff]
    %v1707 = vld [vmem:[#allocation8 + $0x78] sm:$0xff]
    %v1708 = vld [vmem:[#allocation8 + $0x80] sm:$0xff]
    %v1709 = vld [vmem:[#allocation8 + $0x88] sm:$0xff]
    %v1710 = vld [vmem:[#allocation8 + $0x90] sm:$0xff]
    %v1711 = vld [vmem:[#allocation8 + $0x98] sm:$0xff]
    %v1712 = vld [vmem:[#allocation8 + $0xa0] sm:$0xff]
    %v1713 = vld [vmem:[#allocation8 + $0xa8] sm:$0xff]
    %v1714 = vld [vmem:[#allocation8 + $0xb0] sm:$0xff]
    %v1715 = vld [vmem:[#allocation8 + $0xb8] sm:$0xff]
    %v1716 = vld [vmem:[#allocation8 + $0xc0] sm:$0xff]
    %v1717 = vld [vmem:[#allocation8 + $0xc8] sm:$0xff]
    %v1718 = vld [vmem:[#allocation8 + $0xd0] sm:$0xff]
    %v1719 = vld [vmem:[#allocation8 + $0xd8] sm:$0xff]
    %v1720 = vld [vmem:[#allocation8 + $0xe0] sm:$0xff]
    %v1721 = vld [vmem:[#allocation8 + $0xe8] sm:$0xff]
    %v1722 = vld [vmem:[#allocation8 + $0xf0] sm:$0xff]
    %v1723 = vld [vmem:[#allocation8 + $0xf8] sm:$0xff]
    %v1724 = vld [vmem:[#allocation8 + $0x100] sm:$0xff]
    %v1725 = vld [vmem:[#allocation8 + $0x108] sm:$0xff]
    %v1726 = vld [vmem:[#allocation8 + $0x110] sm:$0xff]
    %v1727 = vld [vmem:[#allocation8 + $0x118] sm:$0xff]
    %v1728 = vld [vmem:[#allocation8 + $0x120] sm:$0xff]
    %v1729 = vld [vmem:[#allocation8 + $0x128] sm:$0xff]
    %v1730 = vld [vmem:[#allocation8 + $0x130] sm:$0xff]
    %v1731 = vld [vmem:[#allocation8 + $0x138] sm:$0xff]
    %v1732 = vld [vmem:[#allocation8 + $0x140] sm:$0xff]
    %v1733 = vld [vmem:[#allocation8 + $0x148] sm:$0xff]
    %v1734 = vld [vmem:[#allocation8 + $0x150] sm:$0xff]
    %v1735 = vld [vmem:[#allocation8 + $0x158] sm:$0xff]
    %v1736 = vld [vmem:[#allocation8 + $0x160] sm:$0xff]
    %v1737 = vld [vmem:[#allocation8 + $0x168] sm:$0xff]
    %v1738 = vld [vmem:[#allocation8 + $0x170] sm:$0xff]
    %v1739 = vld [vmem:[#allocation8 + $0x178] sm:$0xff]
    %v1740 = vld [vmem:[#allocation8 + $0x180] sm:$0xff]
    %v1741 = vld [vmem:[#allocation8 + $0x188] sm:$0xff]
    %v1742 = vld [vmem:[#allocation8 + $0x190] sm:$0xff]
    %v1743 = vld [vmem:[#allocation8 + $0x198] sm:$0xff]
    %v1744 = vld [vmem:[#allocation8 + $0x1a0] sm:$0xff]
    %v1745 = vld [vmem:[#allocation8 + $0x1a8] sm:$0xff]
    %v1746 = vld [vmem:[#allocation8 + $0x1b0] sm:$0xff]
    %v1747 = vld [vmem:[#allocation8 + $0x1b8] sm:$0xff]
    %v1748 = vld [vmem:[#allocation8 + $0x1c0] sm:$0xff]
    %v1749 = vld [vmem:[#allocation8 + $0x1c8] sm:$0xff]
    %v1750 = vld [vmem:[#allocation8 + $0x1d0] sm:$0xff]
    %v1751 = vld [vmem:[#allocation8 + $0x1d8] sm:$0xff]
    %v1752 = vld [vmem:[#allocation8 + $0x1e0] sm:$0xff]
    %v1753 = vld [vmem:[#allocation8 + $0x1e8] sm:$0xff]
    %v1754 = vld [vmem:[#allocation8 + $0x1f0] sm:$0xff]
    %v1755 = vld [vmem:[#allocation8 + $0x1f8] sm:$0xff]
    %v1756 = vld [vmem:[#allocation8 + $0x200] sm:$0xff]
    %v1757 = vld [vmem:[#allocation8 + $0x208] sm:$0xff]
    %v1758 = vld [vmem:[#allocation8 + $0x210] sm:$0xff]
    %v1759 = vld [vmem:[#allocation8 + $0x218] sm:$0xff]
    %v1760 = vld [vmem:[#allocation8 + $0x220] sm:$0xff]
    %v1761 = vld [vmem:[#allocation8 + $0x228] sm:$0xff]
    %v1762 = vld [vmem:[#allocation8 + $0x230] sm:$0xff]
    %v1763 = vld [vmem:[#allocation8 + $0x238] sm:$0xff]
    %v1764 = vld [vmem:[#allocation8 + $0x240] sm:$0xff]
    %v1765 = vld [vmem:[#allocation8 + $0x248] sm:$0xff]
    %v1766 = vld [vmem:[#allocation8 + $0x250] sm:$0xff]
    %v1767 = vld [vmem:[#allocation8 + $0x258] sm:$0xff]
    %v1768 = vld [vmem:[#allocation8 + $0x260] sm:$0xff]
    %v1769 = vld [vmem:[#allocation8 + $0x268] sm:$0xff]
    %v1770 = vld [vmem:[#allocation8 + $0x270] sm:$0xff]
    %v1771 = vld [vmem:[#allocation8 + $0x278] sm:$0xff]
    %v1772 = vld [vmem:[#allocation8 + $0x280] sm:$0xff]
    %v1773 = vld [vmem:[#allocation8 + $0x288] sm:$0xff]
    %v1774 = vld [vmem:[#allocation8 + $0x290] sm:$0xff]
    %v1775 = vld [vmem:[#allocation8 + $0x298] sm:$0xff]
    %v1776 = vld [vmem:[#allocation8 + $0x2a0] sm:$0xff]
    %v1777 = vld [vmem:[#allocation8 + $0x2a8] sm:$0xff]
    %v1778 = vld [vmem:[#allocation8 + $0x2b0] sm:$0xff]
    %v1779 = vld [vmem:[#allocation8 + $0x2b8] sm:$0xff]
    %v1780 = vld [vmem:[#allocation8 + $0x2c0] sm:$0xff]
    %v1781 = vld [vmem:[#allocation8 + $0x2c8] sm:$0xff]
    %v1782 = vld [vmem:[#allocation8 + $0x2d0] sm:$0xff]
    %v1783 = vld [vmem:[#allocation8 + $0x2d8] sm:$0xff]
    %v1784 = vld [vmem:[#allocation8 + $0x2e0] sm:$0xff]
    %v1785 = vld [vmem:[#allocation8 + $0x2e8] sm:$0xff]
    %v1786 = vld [vmem:[#allocation8 + $0x2f0] sm:$0xff]
    %v1787 = vld [vmem:[#allocation8 + $0x2f8] sm:$0xff]
    %v1788 = vld [vmem:[#allocation8 + $0x300] sm:$0xff]
    %v1789 = vld [vmem:[#allocation8 + $0x308] sm:$0xff]
    %v1790 = vld [vmem:[#allocation8 + $0x310] sm:$0xff]
    %v1791 = vld [vmem:[#allocation8 + $0x318] sm:$0xff]
    %v1792 = vld [vmem:[#allocation8 + $0x320] sm:$0xff]
    %v1793 = vld [vmem:[#allocation8 + $0x328] sm:$0xff]
    %v1794 = vld [vmem:[#allocation8 + $0x330] sm:$0xff]
    %v1795 = vld [vmem:[#allocation8 + $0x338] sm:$0xff]
    %v1796 = vld [vmem:[#allocation8 + $0x340] sm:$0xff]
    %v1797 = vld [vmem:[#allocation8 + $0x348] sm:$0xff]
    %v1798 = vld [vmem:[#allocation8 + $0x350] sm:$0xff]
    %v1799 = vld [vmem:[#allocation8 + $0x358] sm:$0xff]
    %v1800 = vld [vmem:[#allocation8 + $0x360] sm:$0xff]
    %v1801 = vld [vmem:[#allocation8 + $0x368] sm:$0xff]
    %v1802 = vld [vmem:[#allocation8 + $0x370] sm:$0xff]
    %v1803 = vld [vmem:[#allocation8 + $0x378] sm:$0xff]
    %v1804 = vld [vmem:[#allocation8 + $0x380] sm:$0xff]
    %v1805 = vld [vmem:[#allocation8 + $0x388] sm:$0xff]
    %v1806 = vld [vmem:[#allocation8 + $0x390] sm:$0xff]
    %v1807 = vld [vmem:[#allocation8 + $0x398] sm:$0xff]
    %v1808 = vld [vmem:[#allocation8 + $0x3a0] sm:$0xff]
    %v1809 = vld [vmem:[#allocation8 + $0x3a8] sm:$0xff]
    %v1810 = vld [vmem:[#allocation8 + $0x3b0] sm:$0xff]
    %v1811 = vld [vmem:[#allocation8 + $0x3b8] sm:$0xff]
    %v1812 = vld [vmem:[#allocation8 + $0x3c0] sm:$0xff]
    %v1813 = vld [vmem:[#allocation8 + $0x3c8] sm:$0xff]
    %v1814 = vld [vmem:[#allocation8 + $0x3d0] sm:$0xff]
    %v1815 = vld [vmem:[#allocation8 + $0x3d8] sm:$0xff]
    %v1816 = vld [vmem:[#allocation8 + $0x3e0] sm:$0xff]
    %v1817 = vld [vmem:[#allocation8 + $0x3e8] sm:$0xff]
    %v1818 = vld [vmem:[#allocation8 + $0x3f0] sm:$0xff]
    %v1819 = vld [vmem:[#allocation8 + $0x3f8] sm:$0xff]
    %v1820 = vld [vmem:[#allocation10] sm:$0xf]
    %v1822 = vperm.slane %v1820, 0
    %v1823 = vperm.slane %v1820, 1
    %v1824 = vperm.slane %v1820, 2
    %v1825 = vperm.slane %v1820, 3
    %v1958 = vunpack.c.l.b16 %v1692
    %v1959 = vunpack.c.h.b16 %v1692
    %v1960 = vunpack.c.l.b16 %v1693
    %v1961 = vunpack.c.h.b16 %v1693
    %v1962 = vunpack.c.l.b16 %v1694
    %v1963 = vunpack.c.h.b16 %v1694
    %v1964 = vunpack.c.l.b16 %v1695
    %v1965 = vunpack.c.h.b16 %v1695
    %v1966 = vunpack.c.l.b16 %v1696
    %v1967 = vunpack.c.h.b16 %v1696
    %v1968 = vunpack.c.l.b16 %v1697
    %v1969 = vunpack.c.h.b16 %v1697
    %v1970 = vunpack.c.l.b16 %v1698
    %v1971 = vunpack.c.h.b16 %v1698
    %v1972 = vunpack.c.l.b16 %v1699
    %v1973 = vunpack.c.h.b16 %v1699
    %v1974 = vunpack.c.l.b16 %v1700
    %v1975 = vunpack.c.h.b16 %v1700
    %v1976 = vunpack.c.l.b16 %v1701
    %v1977 = vunpack.c.h.b16 %v1701
    %v1978 = vunpack.c.l.b16 %v1702
    %v1979 = vunpack.c.h.b16 %v1702
    %v1980 = vunpack.c.l.b16 %v1703
    %v1981 = vunpack.c.h.b16 %v1703
    %v1982 = vunpack.c.l.b16 %v1704
    %v1983 = vunpack.c.h.b16 %v1704
    %v1984 = vunpack.c.l.b16 %v1705
    %v1985 = vunpack.c.h.b16 %v1705
    %v1986 = vunpack.c.l.b16 %v1706
    %v1987 = vunpack.c.h.b16 %v1706
    %v1988 = vunpack.c.l.b16 %v1707
    %v1989 = vunpack.c.h.b16 %v1707
    %v1990 = vunpack.c.l.b16 %v1708
    %v1991 = vunpack.c.h.b16 %v1708
    %v1992 = vunpack.c.l.b16 %v1709
    %v1993 = vunpack.c.h.b16 %v1709
    %v1994 = vunpack.c.l.b16 %v1710
    %v1995 = vunpack.c.h.b16 %v1710
    %v1996 = vunpack.c.l.b16 %v1711
    %v1997 = vunpack.c.h.b16 %v1711
    %v1998 = vunpack.c.l.b16 %v1712
    %v1999 = vunpack.c.h.b16 %v1712
    %v2000 = vunpack.c.l.b16 %v1713
    %v2001 = vunpack.c.h.b16 %v1713
    %v2002 = vunpack.c.l.b16 %v1714
    %v2003 = vunpack.c.h.b16 %v1714
    %v2004 = vunpack.c.l.b16 %v1715
    %v2005 = vunpack.c.h.b16 %v1715
    %v2006 = vunpack.c.l.b16 %v1716
    %v2007 = vunpack.c.h.b16 %v1716
    %v2008 = vunpack.c.l.b16 %v1717
    %v2009 = vunpack.c.h.b16 %v1717
    %v2010 = vunpack.c.l.b16 %v1718
    %v2011 = vunpack.c.h.b16 %v1718
    %v2012 = vunpack.c.l.b16 %v1719
    %v2013 = vunpack.c.h.b16 %v1719
    %v2014 = vunpack.c.l.b16 %v1720
    %v2015 = vunpack.c.h.b16 %v1720
    %v2016 = vunpack.c.l.b16 %v1721
    %v2017 = vunpack.c.h.b16 %v1721
    %v2018 = vunpack.c.l.b16 %v1722
    %v2019 = vunpack.c.h.b16 %v1722
    %v2020 = vunpack.c.l.b16 %v1723
    %v2021 = vunpack.c.h.b16 %v1723
    %v2022 = vunpack.c.l.b16 %v1724
    %v2023 = vunpack.c.h.b16 %v1724
    %v2024 = vunpack.c.l.b16 %v1725
    %v2025 = vunpack.c.h.b16 %v1725
    %v2026 = vunpack.c.l.b16 %v1726
    %v2027 = vunpack.c.h.b16 %v1726
    %v2028 = vunpack.c.l.b16 %v1727
    %v2029 = vunpack.c.h.b16 %v1727
    %v2030 = vunpack.c.l.b16 %v1728
    %v2031 = vunpack.c.h.b16 %v1728
    %v2032 = vunpack.c.l.b16 %v1729
    %v2033 = vunpack.c.h.b16 %v1729
    %v2034 = vunpack.c.l.b16 %v1730
    %v2035 = vunpack.c.h.b16 %v1730
    %v2036 = vunpack.c.l.b16 %v1731
    %v2037 = vunpack.c.h.b16 %v1731
    %v2038 = vunpack.c.l.b16 %v1732
    %v2039 = vunpack.c.h.b16 %v1732
    %v2040 = vunpack.c.l.b16 %v1733
    %v2041 = vunpack.c.h.b16 %v1733
    %v2042 = vunpack.c.l.b16 %v1734
    %v2043 = vunpack.c.h.b16 %v1734
    %v2044 = vunpack.c.l.b16 %v1735
    %v2045 = vunpack.c.h.b16 %v1735
    %v2046 = vunpack.c.l.b16 %v1736
    %v2047 = vunpack.c.h.b16 %v1736
    %v2048 = vunpack.c.l.b16 %v1737
    %v2049 = vunpack.c.h.b16 %v1737
    %v2050 = vunpack.c.l.b16 %v1738
    %v2051 = vunpack.c.h.b16 %v1738
    %v2052 = vunpack.c.l.b16 %v1739
    %v2053 = vunpack.c.h.b16 %v1739
    %v2054 = vunpack.c.l.b16 %v1740
    %v2055 = vunpack.c.h.b16 %v1740
    %v2056 = vunpack.c.l.b16 %v1741
    %v2057 = vunpack.c.h.b16 %v1741
    %v2058 = vunpack.c.l.b16 %v1742
    %v2059 = vunpack.c.h.b16 %v1742
    %v2060 = vunpack.c.l.b16 %v1743
    %v2061 = vunpack.c.h.b16 %v1743
    %v2062 = vunpack.c.l.b16 %v1744
    %v2063 = vunpack.c.h.b16 %v1744
    %v2064 = vunpack.c.l.b16 %v1745
    %v2065 = vunpack.c.h.b16 %v1745
    %v2066 = vunpack.c.l.b16 %v1746
    %v2067 = vunpack.c.h.b16 %v1746
    %v2068 = vunpack.c.l.b16 %v1747
    %v2069 = vunpack.c.h.b16 %v1747
    %v2070 = vunpack.c.l.b16 %v1748
    %v2071 = vunpack.c.h.b16 %v1748
    %v2072 = vunpack.c.l.b16 %v1749
    %v2073 = vunpack.c.h.b16 %v1749
    %v2074 = vunpack.c.l.b16 %v1750
    %v2075 = vunpack.c.h.b16 %v1750
    %v2076 = vunpack.c.l.b16 %v1751
    %v2077 = vunpack.c.h.b16 %v1751
    %v2078 = vunpack.c.l.b16 %v1752
    %v2079 = vunpack.c.h.b16 %v1752
    %v2080 = vunpack.c.l.b16 %v1753
    %v2081 = vunpack.c.h.b16 %v1753
    %v2082 = vunpack.c.l.b16 %v1754
    %v2083 = vunpack.c.h.b16 %v1754
    %v2084 = vunpack.c.l.b16 %v1755
    %v2085 = vunpack.c.h.b16 %v1755
    %v2086 = vunpack.c.l.b16 %v1756
    %v2087 = vunpack.c.h.b16 %v1756
    %v2088 = vunpack.c.l.b16 %v1757
    %v2089 = vunpack.c.h.b16 %v1757
    %v2090 = vunpack.c.l.b16 %v1758
    %v2091 = vunpack.c.h.b16 %v1758
    %v2092 = vunpack.c.l.b16 %v1759
    %v2093 = vunpack.c.h.b16 %v1759
    %v2094 = vunpack.c.l.b16 %v1760
    %v2095 = vunpack.c.h.b16 %v1760
    %v2096 = vunpack.c.l.b16 %v1761
    %v2097 = vunpack.c.h.b16 %v1761
    %v2098 = vunpack.c.l.b16 %v1762
    %v2099 = vunpack.c.h.b16 %v1762
    %v2100 = vunpack.c.l.b16 %v1763
    %v2101 = vunpack.c.h.b16 %v1763
    %v2102 = vunpack.c.l.b16 %v1764
    %v2103 = vunpack.c.h.b16 %v1764
    %v2104 = vunpack.c.l.b16 %v1765
    %v2105 = vunpack.c.h.b16 %v1765
    %v2106 = vunpack.c.l.b16 %v1766
    %v2107 = vunpack.c.h.b16 %v1766
    %v2108 = vunpack.c.l.b16 %v1767
    %v2109 = vunpack.c.h.b16 %v1767
    %v2110 = vunpack.c.l.b16 %v1768
    %v2111 = vunpack.c.h.b16 %v1768
    %v2112 = vunpack.c.l.b16 %v1769
    %v2113 = vunpack.c.h.b16 %v1769
    %v2114 = vunpack.c.l.b16 %v1770
    %v2115 = vunpack.c.h.b16 %v1770
    %v2116 = vunpack.c.l.b16 %v1771
    %v2117 = vunpack.c.h.b16 %v1771
    %v2118 = vunpack.c.l.b16 %v1772
    %v2119 = vunpack.c.h.b16 %v1772
    %v2120 = vunpack.c.l.b16 %v1773
    %v2121 = vunpack.c.h.b16 %v1773
    %v2122 = vunpack.c.l.b16 %v1774
    %v2123 = vunpack.c.h.b16 %v1774
    %v2124 = vunpack.c.l.b16 %v1775
    %v2125 = vunpack.c.h.b16 %v1775
    %v2126 = vunpack.c.l.b16 %v1776
    %v2127 = vunpack.c.h.b16 %v1776
    %v2128 = vunpack.c.l.b16 %v1777
    %v2129 = vunpack.c.h.b16 %v1777
    %v2130 = vunpack.c.l.b16 %v1778
    %v2131 = vunpack.c.h.b16 %v1778
    %v2132 = vunpack.c.l.b16 %v1779
    %v2133 = vunpack.c.h.b16 %v1779
    %v2134 = vunpack.c.l.b16 %v1780
    %v2135 = vunpack.c.h.b16 %v1780
    %v2136 = vunpack.c.l.b16 %v1781
    %v2137 = vunpack.c.h.b16 %v1781
    %v2138 = vunpack.c.l.b16 %v1782
    %v2139 = vunpack.c.h.b16 %v1782
    %v2140 = vunpack.c.l.b16 %v1783
    %v2141 = vunpack.c.h.b16 %v1783
    %v2142 = vunpack.c.l.b16 %v1784
    %v2143 = vunpack.c.h.b16 %v1784
    %v2144 = vunpack.c.l.b16 %v1785
    %v2145 = vunpack.c.h.b16 %v1785
    %v2146 = vunpack.c.l.b16 %v1786
    %v2147 = vunpack.c.h.b16 %v1786
    %v2148 = vunpack.c.l.b16 %v1787
    %v2149 = vunpack.c.h.b16 %v1787
    %v2150 = vunpack.c.l.b16 %v1788
    %v2151 = vunpack.c.h.b16 %v1788
    %v2152 = vunpack.c.l.b16 %v1789
    %v2153 = vunpack.c.h.b16 %v1789
    %v2154 = vunpack.c.l.b16 %v1790
    %v2155 = vunpack.c.h.b16 %v1790
    %v2156 = vunpack.c.l.b16 %v1791
    %v2157 = vunpack.c.h.b16 %v1791
    %v2158 = vunpack.c.l.b16 %v1792
    %v2159 = vunpack.c.h.b16 %v1792
    %v2160 = vunpack.c.l.b16 %v1793
    %v2161 = vunpack.c.h.b16 %v1793
    %v2162 = vunpack.c.l.b16 %v1794
    %v2163 = vunpack.c.h.b16 %v1794
    %v2164 = vunpack.c.l.b16 %v1795
    %v2165 = vunpack.c.h.b16 %v1795
    %v2166 = vunpack.c.l.b16 %v1796
    %v2167 = vunpack.c.h.b16 %v1796
    %v2168 = vunpack.c.l.b16 %v1797
    %v2169 = vunpack.c.h.b16 %v1797
    %v2170 = vunpack.c.l.b16 %v1798
    %v2171 = vunpack.c.h.b16 %v1798
    %v2172 = vunpack.c.l.b16 %v1799
    %v2173 = vunpack.c.h.b16 %v1799
    %v2174 = vunpack.c.l.b16 %v1800
    %v2175 = vunpack.c.h.b16 %v1800
    %v2176 = vunpack.c.l.b16 %v1801
    %v2177 = vunpack.c.h.b16 %v1801
    %v2178 = vunpack.c.l.b16 %v1802
    %v2179 = vunpack.c.h.b16 %v1802
    %v2180 = vunpack.c.l.b16 %v1803
    %v2181 = vunpack.c.h.b16 %v1803
    %v2182 = vunpack.c.l.b16 %v1804
    %v2183 = vunpack.c.h.b16 %v1804
    %v2184 = vunpack.c.l.b16 %v1805
    %v2185 = vunpack.c.h.b16 %v1805
    %v2186 = vunpack.c.l.b16 %v1806
    %v2187 = vunpack.c.h.b16 %v1806
    %v2188 = vunpack.c.l.b16 %v1807
    %v2189 = vunpack.c.h.b16 %v1807
    %v2190 = vunpack.c.l.b16 %v1808
    %v2191 = vunpack.c.h.b16 %v1808
    %v2192 = vunpack.c.l.b16 %v1809
    %v2193 = vunpack.c.h.b16 %v1809
    %v2194 = vunpack.c.l.b16 %v1810
    %v2195 = vunpack.c.h.b16 %v1810
    %v2196 = vunpack.c.l.b16 %v1811
    %v2197 = vunpack.c.h.b16 %v1811
    %v2198 = vunpack.c.l.b16 %v1812
    %v2199 = vunpack.c.h.b16 %v1812
    %v2200 = vunpack.c.l.b16 %v1813
    %v2201 = vunpack.c.h.b16 %v1813
    %v2202 = vunpack.c.l.b16 %v1814
    %v2203 = vunpack.c.h.b16 %v1814
    %v2204 = vunpack.c.l.b16 %v1815
    %v2205 = vunpack.c.h.b16 %v1815
    %v2206 = vunpack.c.l.b16 %v1816
    %v2207 = vunpack.c.h.b16 %v1816
    %v2208 = vunpack.c.l.b16 %v1817
    %v2209 = vunpack.c.h.b16 %v1817
    %v2210 = vunpack.c.l.b16 %v1818
    %v2211 = vunpack.c.h.b16 %v1818
    %v2212 = vunpack.c.l.b16 %v1819
    %v2213 = vunpack.c.h.b16 %v1819
    %v2214 = vpack.c.b16 %v1962, %v1958
    %v2215 = vpack.c.b16 %v1963, %v1959
    %v2216 = vpack.c.b16 %v1964, %v1960
    %v2217 = vpack.c.b16 %v1965, %v1961
    %v2218 = vpack.c.b16 %v1970, %v1966
    %v2219 = vpack.c.b16 %v1971, %v1967
    %v2220 = vpack.c.b16 %v1972, %v1968
    %v2221 = vpack.c.b16 %v1973, %v1969
    %v2222 = vpack.c.b16 %v1978, %v1974
    %v2223 = vpack.c.b16 %v1979, %v1975
    %v2224 = vpack.c.b16 %v1980, %v1976
    %v2225 = vpack.c.b16 %v1981, %v1977
    %v2226 = vpack.c.b16 %v1986, %v1982
    %v2227 = vpack.c.b16 %v1987, %v1983
    %v2228 = vpack.c.b16 %v1988, %v1984
    %v2229 = vpack.c.b16 %v1989, %v1985
    %v2230 = vpack.c.b16 %v1994, %v1990
    %v2231 = vpack.c.b16 %v1995, %v1991
    %v2232 = vpack.c.b16 %v1996, %v1992
    %v2233 = vpack.c.b16 %v1997, %v1993
    %v2234 = vpack.c.b16 %v2002, %v1998
    %v2235 = vpack.c.b16 %v2003, %v1999
    %v2236 = vpack.c.b16 %v2004, %v2000
    %v2237 = vpack.c.b16 %v2005, %v2001
    %v2238 = vpack.c.b16 %v2010, %v2006
    %v2239 = vpack.c.b16 %v2011, %v2007
    %v2240 = vpack.c.b16 %v2012, %v2008
    %v2241 = vpack.c.b16 %v2013, %v2009
    %v2242 = vpack.c.b16 %v2018, %v2014
    %v2243 = vpack.c.b16 %v2019, %v2015
    %v2244 = vpack.c.b16 %v2020, %v2016
    %v2245 = vpack.c.b16 %v2021, %v2017
    %v2246 = vpack.c.b16 %v2026, %v2022
    %v2247 = vpack.c.b16 %v2027, %v2023
    %v2248 = vpack.c.b16 %v2028, %v2024
    %v2249 = vpack.c.b16 %v2029, %v2025
    %v2250 = vpack.c.b16 %v2034, %v2030
    %v2251 = vpack.c.b16 %v2035, %v2031
    %v2252 = vpack.c.b16 %v2036, %v2032
    %v2253 = vpack.c.b16 %v2037, %v2033
    %v2254 = vpack.c.b16 %v2042, %v2038
    %v2255 = vpack.c.b16 %v2043, %v2039
    %v2256 = vpack.c.b16 %v2044, %v2040
    %v2257 = vpack.c.b16 %v2045, %v2041
    %v2258 = vpack.c.b16 %v2050, %v2046
    %v2259 = vpack.c.b16 %v2051, %v2047
    %v2260 = vpack.c.b16 %v2052, %v2048
    %v2261 = vpack.c.b16 %v2053, %v2049
    %v2262 = vpack.c.b16 %v2058, %v2054
    %v2263 = vpack.c.b16 %v2059, %v2055
    %v2264 = vpack.c.b16 %v2060, %v2056
    %v2265 = vpack.c.b16 %v2061, %v2057
    %v2266 = vpack.c.b16 %v2066, %v2062
    %v2267 = vpack.c.b16 %v2067, %v2063
    %v2268 = vpack.c.b16 %v2068, %v2064
    %v2269 = vpack.c.b16 %v2069, %v2065
    %v2270 = vpack.c.b16 %v2074, %v2070
    %v2271 = vpack.c.b16 %v2075, %v2071
    %v2272 = vpack.c.b16 %v2076, %v2072
    %v2273 = vpack.c.b16 %v2077, %v2073
    %v2274 = vpack.c.b16 %v2082, %v2078
    %v2275 = vpack.c.b16 %v2083, %v2079
    %v2276 = vpack.c.b16 %v2084, %v2080
    %v2277 = vpack.c.b16 %v2085, %v2081
    %v2278 = vpack.c.b16 %v2090, %v2086
    %v2279 = vpack.c.b16 %v2091, %v2087
    %v2280 = vpack.c.b16 %v2092, %v2088
    %v2281 = vpack.c.b16 %v2093, %v2089
    %v2282 = vpack.c.b16 %v2098, %v2094
    %v2283 = vpack.c.b16 %v2099, %v2095
    %v2284 = vpack.c.b16 %v2100, %v2096
    %v2285 = vpack.c.b16 %v2101, %v2097
    %v2286 = vpack.c.b16 %v2106, %v2102
    %v2287 = vpack.c.b16 %v2107, %v2103
    %v2288 = vpack.c.b16 %v2108, %v2104
    %v2289 = vpack.c.b16 %v2109, %v2105
    %v2290 = vpack.c.b16 %v2114, %v2110
    %v2291 = vpack.c.b16 %v2115, %v2111
    %v2292 = vpack.c.b16 %v2116, %v2112
    %v2293 = vpack.c.b16 %v2117, %v2113
    %v2294 = vpack.c.b16 %v2122, %v2118
    %v2295 = vpack.c.b16 %v2123, %v2119
    %v2296 = vpack.c.b16 %v2124, %v2120
    %v2297 = vpack.c.b16 %v2125, %v2121
    %v2298 = vpack.c.b16 %v2130, %v2126
    %v2299 = vpack.c.b16 %v2131, %v2127
    %v2300 = vpack.c.b16 %v2132, %v2128
    %v2301 = vpack.c.b16 %v2133, %v2129
    %v2302 = vpack.c.b16 %v2138, %v2134
    %v2303 = vpack.c.b16 %v2139, %v2135
    %v2304 = vpack.c.b16 %v2140, %v2136
    %v2305 = vpack.c.b16 %v2141, %v2137
    %v2306 = vpack.c.b16 %v2146, %v2142
    %v2307 = vpack.c.b16 %v2147, %v2143
    %v2308 = vpack.c.b16 %v2148, %v2144
    %v2309 = vpack.c.b16 %v2149, %v2145
    %v2310 = vpack.c.b16 %v2154, %v2150
    %v2311 = vpack.c.b16 %v2155, %v2151
    %v2312 = vpack.c.b16 %v2156, %v2152
    %v2313 = vpack.c.b16 %v2157, %v2153
    %v2314 = vpack.c.b16 %v2162, %v2158
    %v2315 = vpack.c.b16 %v2163, %v2159
    %v2316 = vpack.c.b16 %v2164, %v2160
    %v2317 = vpack.c.b16 %v2165, %v2161
    %v2318 = vpack.c.b16 %v2170, %v2166
    %v2319 = vpack.c.b16 %v2171, %v2167
    %v2320 = vpack.c.b16 %v2172, %v2168
    %v2321 = vpack.c.b16 %v2173, %v2169
    %v2322 = vpack.c.b16 %v2178, %v2174
    %v2323 = vpack.c.b16 %v2179, %v2175
    %v2324 = vpack.c.b16 %v2180, %v2176
    %v2325 = vpack.c.b16 %v2181, %v2177
    %v2326 = vpack.c.b16 %v2186, %v2182
    %v2327 = vpack.c.b16 %v2187, %v2183
    %v2328 = vpack.c.b16 %v2188, %v2184
    %v2329 = vpack.c.b16 %v2189, %v2185
    %v2330 = vpack.c.b16 %v2194, %v2190
    %v2331 = vpack.c.b16 %v2195, %v2191
    %v2332 = vpack.c.b16 %v2196, %v2192
    %v2333 = vpack.c.b16 %v2197, %v2193
    %v2334 = vpack.c.b16 %v2202, %v2198
    %v2335 = vpack.c.b16 %v2203, %v2199
    %v2336 = vpack.c.b16 %v2204, %v2200
    %v2337 = vpack.c.b16 %v2205, %v2201
    %v2338 = vpack.c.b16 %v2210, %v2206
    %v2339 = vpack.c.b16 %v2211, %v2207
    %v2340 = vpack.c.b16 %v2212, %v2208
    %v2341 = vpack.c.b16 %v2213, %v2209
    %2470 = vmatpush.bf16.msra.mxu0 %v2242
    %2471 = vmatpush.bf16.msra.mxu0 %v2238
    %2472 = vmatpush.bf16.msra.mxu0 %v2234
    %2473 = vmatpush.bf16.msra.mxu0 %v2230
    %2474 = vmatpush.bf16.msra.mxu0 %v2226
    %2475 = vmatpush.bf16.msra.mxu0 %v2222
    %2476 = vmatpush.bf16.msra.mxu0 %v2218
    %2477 = vmatpush.bf16.msra.mxu0 %v2214
    %2478 = vmatmul.bf16.gmra.mxu0 %v1688
    %v2479 = vpop.f32.mrf.mxu0
    %v2480 = vadd.f32 %v1822, %v2479
    %v2481 = vpop.f32.mrf.mxu0
    %2482 = vdwg.mxu0
    %2483 = vmatpush.bf16.msra.mxu0 %v2274
    %2484 = vmatpush.bf16.msra.mxu0 %v2270
    %2485 = vmatpush.bf16.msra.mxu0 %v2266
    %2486 = vmatpush.bf16.msra.mxu0 %v2262
    %2487 = vmatpush.bf16.msra.mxu0 %v2258
    %2488 = vmatpush.bf16.msra.mxu0 %v2254
    %2489 = vmatpush.bf16.msra.mxu0 %v2250
    %2490 = vmatpush.bf16.msra.mxu0 %v2246
    %2491 = vmatmul.bf16.gmra.mxu0 %v1689
    %v2492 = vpop.f32.mrf.mxu0
    %v2493 = vadd.f32 %v2480, %v2492
    %v2494 = vpop.f32.mrf.mxu0
    %2495 = vdwg.mxu0
    %2496 = vmatpush.bf16.msra.mxu0 %v2306
    %2497 = vmatpush.bf16.msra.mxu0 %v2302
    %2498 = vmatpush.bf16.msra.mxu0 %v2298
    %2499 = vmatpush.bf16.msra.mxu0 %v2294
    %2500 = vmatpush.bf16.msra.mxu0 %v2290
    %2501 = vmatpush.bf16.msra.mxu0 %v2286
    %2502 = vmatpush.bf16.msra.mxu0 %v2282
    %2503 = vmatpush.bf16.msra.mxu0 %v2278
    %2504 = vmatmul.bf16.gmra.mxu0 %v1690
    %v2505 = vpop.f32.mrf.mxu0
    %v2506 = vadd.f32 %v2493, %v2505
    %v2507 = vpop.f32.mrf.mxu0
    %2508 = vdwg.mxu0
    %2509 = vmatpush.bf16.msra.mxu0 %v2338
    %2510 = vmatpush.bf16.msra.mxu0 %v2334
    %2511 = vmatpush.bf16.msra.mxu0 %v2330
    %2512 = vmatpush.bf16.msra.mxu0 %v2326
    %2513 = vmatpush.bf16.msra.mxu0 %v2322
    %2514 = vmatpush.bf16.msra.mxu0 %v2318
    %2515 = vmatpush.bf16.msra.mxu0 %v2314
    %2516 = vmatpush.bf16.msra.mxu0 %v2310
    %2517 = vmatmul.bf16.gmra.mxu0 %v1691
    %v2518 = vpop.f32.mrf.mxu0
    %v2519 = vadd.f32 %v2506, %v2518
    %v2520 = vpop.f32.mrf.mxu0
    %2521 = vdwg.mxu0
    %2522 = vmatpush.bf16.msra.mxu0 %v2243
    %2523 = vmatpush.bf16.msra.mxu0 %v2239
    %2524 = vmatpush.bf16.msra.mxu0 %v2235
    %2525 = vmatpush.bf16.msra.mxu0 %v2231
    %2526 = vmatpush.bf16.msra.mxu0 %v2227
    %2527 = vmatpush.bf16.msra.mxu0 %v2223
    %2528 = vmatpush.bf16.msra.mxu0 %v2219
    %2529 = vmatpush.bf16.msra.mxu0 %v2215
    %2530 = vmatmul.bf16.gmra.mxu0 %v1688
    %v2531 = vpop.f32.mrf.mxu0
    %v2532 = vadd.f32 %v1823, %v2531
    %v2533 = vpop.f32.mrf.mxu0
    %2534 = vdwg.mxu0
    %2535 = vmatpush.bf16.msra.mxu0 %v2275
    %2536 = vmatpush.bf16.msra.mxu0 %v2271
    %2537 = vmatpush.bf16.msra.mxu0 %v2267
    %2538 = vmatpush.bf16.msra.mxu0 %v2263
    %2539 = vmatpush.bf16.msra.mxu0 %v2259
    %2540 = vmatpush.bf16.msra.mxu0 %v2255
    %2541 = vmatpush.bf16.msra.mxu0 %v2251
    %2542 = vmatpush.bf16.msra.mxu0 %v2247
    %2543 = vmatmul.bf16.gmra.mxu0 %v1689
    %v2544 = vpop.f32.mrf.mxu0
    %v2545 = vadd.f32 %v2532, %v2544
    %v2546 = vpop.f32.mrf.mxu0
    %2547 = vdwg.mxu0
    %2548 = vmatpush.bf16.msra.mxu0 %v2307
    %2549 = vmatpush.bf16.msra.mxu0 %v2303
    %2550 = vmatpush.bf16.msra.mxu0 %v2299
    %2551 = vmatpush.bf16.msra.mxu0 %v2295
    %2552 = vmatpush.bf16.msra.mxu0 %v2291
    %2553 = vmatpush.bf16.msra.mxu0 %v2287
    %2554 = vmatpush.bf16.msra.mxu0 %v2283
    %2555 = vmatpush.bf16.msra.mxu0 %v2279
    %2556 = vmatmul.bf16.gmra.mxu0 %v1690
    %v2557 = vpop.f32.mrf.mxu0
    %v2558 = vadd.f32 %v2545, %v2557
    %v2559 = vpop.f32.mrf.mxu0
    %2560 = vdwg.mxu0
    %2561 = vmatpush.bf16.msra.mxu0 %v2339
    %2562 = vmatpush.bf16.msra.mxu0 %v2335
    %2563 = vmatpush.bf16.msra.mxu0 %v2331
    %2564 = vmatpush.bf16.msra.mxu0 %v2327
    %2565 = vmatpush.bf16.msra.mxu0 %v2323
    %2566 = vmatpush.bf16.msra.mxu0 %v2319
    %2567 = vmatpush.bf16.msra.mxu0 %v2315
    %2568 = vmatpush.bf16.msra.mxu0 %v2311
    %2569 = vmatmul.bf16.gmra.mxu0 %v1691
    %v2570 = vpop.f32.mrf.mxu0
    %v2571 = vadd.f32 %v2558, %v2570
    %v2572 = vpop.f32.mrf.mxu0
    %2573 = vdwg.mxu0
    %2574 = vmatpush.bf16.msra.mxu0 %v2244
    %2575 = vmatpush.bf16.msra.mxu0 %v2240
    %2576 = vmatpush.bf16.msra.mxu0 %v2236
    %2577 = vmatpush.bf16.msra.mxu0 %v2232
    %2578 = vmatpush.bf16.msra.mxu0 %v2228
    %2579 = vmatpush.bf16.msra.mxu0 %v2224
    %2580 = vmatpush.bf16.msra.mxu0 %v2220
    %2581 = vmatpush.bf16.msra.mxu0 %v2216
    %2582 = vmatmul.bf16.gmra.mxu0 %v1688
    %v2583 = vpop.f32.mrf.mxu0
    %v2584 = vadd.f32 %v1824, %v2583
    %v2585 = vpop.f32.mrf.mxu0
    %2586 = vdwg.mxu0
    %2587 = vmatpush.bf16.msra.mxu0 %v2276
    %2588 = vmatpush.bf16.msra.mxu0 %v2272
    %2589 = vmatpush.bf16.msra.mxu0 %v2268
    %2590 = vmatpush.bf16.msra.mxu0 %v2264
    %2591 = vmatpush.bf16.msra.mxu0 %v2260
    %2592 = vmatpush.bf16.msra.mxu0 %v2256
    %2593 = vmatpush.bf16.msra.mxu0 %v2252
    %2594 = vmatpush.bf16.msra.mxu0 %v2248
    %2595 = vmatmul.bf16.gmra.mxu0 %v1689
    %v2596 = vpop.f32.mrf.mxu0
    %v2597 = vadd.f32 %v2584, %v2596
    %v2598 = vpop.f32.mrf.mxu0
    %2599 = vdwg.mxu0
    %2600 = vmatpush.bf16.msra.mxu0 %v2308
    %2601 = vmatpush.bf16.msra.mxu0 %v2304
    %2602 = vmatpush.bf16.msra.mxu0 %v2300
    %2603 = vmatpush.bf16.msra.mxu0 %v2296
    %2604 = vmatpush.bf16.msra.mxu0 %v2292
    %2605 = vmatpush.bf16.msra.mxu0 %v2288
    %2606 = vmatpush.bf16.msra.mxu0 %v2284
    %2607 = vmatpush.bf16.msra.mxu0 %v2280
    %2608 = vmatmul.bf16.gmra.mxu0 %v1690
    %v2609 = vpop.f32.mrf.mxu0
    %v2610 = vadd.f32 %v2597, %v2609
    %v2611 = vpop.f32.mrf.mxu0
    %2612 = vdwg.mxu0
    %2613 = vmatpush.bf16.msra.mxu0 %v2340
    %2614 = vmatpush.bf16.msra.mxu0 %v2336
    %2615 = vmatpush.bf16.msra.mxu0 %v2332
    %2616 = vmatpush.bf16.msra.mxu0 %v2328
    %2617 = vmatpush.bf16.msra.mxu0 %v2324
    %2618 = vmatpush.bf16.msra.mxu0 %v2320
    %2619 = vmatpush.bf16.msra.mxu0 %v2316
    %2620 = vmatpush.bf16.msra.mxu0 %v2312
    %2621 = vmatmul.bf16.gmra.mxu0 %v1691
    %v2622 = vpop.f32.mrf.mxu0
    %v2623 = vadd.f32 %v2610, %v2622
    %v2624 = vpop.f32.mrf.mxu0
    %2625 = vdwg.mxu0
    %2626 = vmatpush.bf16.msra.mxu0 %v2245
    %2627 = vmatpush.bf16.msra.mxu0 %v2241
    %2628 = vmatpush.bf16.msra.mxu0 %v2237
    %2629 = vmatpush.bf16.msra.mxu0 %v2233
    %2630 = vmatpush.bf16.msra.mxu0 %v2229
    %2631 = vmatpush.bf16.msra.mxu0 %v2225
    %2632 = vmatpush.bf16.msra.mxu0 %v2221
    %2633 = vmatpush.bf16.msra.mxu0 %v2217
    %2634 = vmatmul.bf16.gmra.mxu0 %v1688
    %v2635 = vpop.f32.mrf.mxu0
    %v2636 = vadd.f32 %v1825, %v2635
    %v2637 = vpop.f32.mrf.mxu0
    %2638 = vdwg.mxu0
    %2639 = vmatpush.bf16.msra.mxu0 %v2277
    %2640 = vmatpush.bf16.msra.mxu0 %v2273
    %2641 = vmatpush.bf16.msra.mxu0 %v2269
    %2642 = vmatpush.bf16.msra.mxu0 %v2265
    %2643 = vmatpush.bf16.msra.mxu0 %v2261
    %2644 = vmatpush.bf16.msra.mxu0 %v2257
    %2645 = vmatpush.bf16.msra.mxu0 %v2253
    %2646 = vmatpush.bf16.msra.mxu0 %v2249
    %2647 = vmatmul.bf16.gmra.mxu0 %v1689
    %v2648 = vpop.f32.mrf.mxu0
    %v2649 = vadd.f32 %v2636, %v2648
    %v2650 = vpop.f32.mrf.mxu0
    %2651 = vdwg.mxu0
    %2652 = vmatpush.bf16.msra.mxu0 %v2309
    %2653 = vmatpush.bf16.msra.mxu0 %v2305
    %2654 = vmatpush.bf16.msra.mxu0 %v2301
    %2655 = vmatpush.bf16.msra.mxu0 %v2297
    %2656 = vmatpush.bf16.msra.mxu0 %v2293
    %2657 = vmatpush.bf16.msra.mxu0 %v2289
    %2658 = vmatpush.bf16.msra.mxu0 %v2285
    %2659 = vmatpush.bf16.msra.mxu0 %v2281
    %2660 = vmatmul.bf16.gmra.mxu0 %v1690
    %v2661 = vpop.f32.mrf.mxu0
    %v2662 = vadd.f32 %v2649, %v2661
    %v2663 = vpop.f32.mrf.mxu0
    %2664 = vdwg.mxu0
    %2665 = vmatpush.bf16.msra.mxu0 %v2341
    %2666 = vmatpush.bf16.msra.mxu0 %v2337
    %2667 = vmatpush.bf16.msra.mxu0 %v2333
    %2668 = vmatpush.bf16.msra.mxu0 %v2329
    %2669 = vmatpush.bf16.msra.mxu0 %v2325
    %2670 = vmatpush.bf16.msra.mxu0 %v2321
    %2671 = vmatpush.bf16.msra.mxu0 %v2317
    %2672 = vmatpush.bf16.msra.mxu0 %v2313
    %2673 = vmatmul.bf16.gmra.mxu0 %v1691
    %v2674 = vpop.f32.mrf.mxu0
    %v2675 = vadd.f32 %v2662, %v2674
    %v2676 = vpop.f32.mrf.mxu0
    %2677 = vdwg.mxu0
    %v2678 = vmax.f32 %v2519, 0.0
    %v2679 = vmax.f32 %v2571, 0.0
    %v2680 = vmax.f32 %v2623, 0.0
    %v2681 = vmax.f32 %v2675, 0.0
    %v2682 = vpack.c.bf16 %v2678, %v2678
    %v2683 = vpack.c.bf16 %v2679, %v2679
    %v2684 = vpack.c.bf16 %v2680, %v2680
    %v2685 = vpack.c.bf16 %v2681, %v2681
    %v2686 = vld [vmem:[#allocation11] sm:$0xf]
    %v2687 = vld [vmem:[#allocation11 + $0x4] sm:$0xf]
    %v2688 = vld [vmem:[#allocation11 + $0x8] sm:$0xf]
    %v2689 = vld [vmem:[#allocation11 + $0xc] sm:$0xf]
    %v2690 = vld [vmem:[#allocation11 + $0x10] sm:$0xf]
    %v2691 = vld [vmem:[#allocation11 + $0x14] sm:$0xf]
    %v2692 = vld [vmem:[#allocation11 + $0x18] sm:$0xf]
    %v2693 = vld [vmem:[#allocation11 + $0x1c] sm:$0xf]
    %v2694 = vld [vmem:[#allocation11 + $0x20] sm:$0xf]
    %v2695 = vld [vmem:[#allocation11 + $0x24] sm:$0xf]
    %v2696 = vld [vmem:[#allocation11 + $0x28] sm:$0xf]
    %v2697 = vld [vmem:[#allocation11 + $0x2c] sm:$0xf]
    %v2698 = vld [vmem:[#allocation11 + $0x30] sm:$0xf]
    %v2699 = vld [vmem:[#allocation11 + $0x34] sm:$0xf]
    %v2700 = vld [vmem:[#allocation11 + $0x38] sm:$0xf]
    %v2701 = vld [vmem:[#allocation11 + $0x3c] sm:$0xf]
    %v2702 = vld [vmem:[#allocation11 + $0x40] sm:$0xf]
    %v2703 = vld [vmem:[#allocation11 + $0x44] sm:$0xf]
    %v2704 = vld [vmem:[#allocation11 + $0x48] sm:$0xf]
    %v2705 = vld [vmem:[#allocation11 + $0x4c] sm:$0xf]
    %v2706 = vld [vmem:[#allocation11 + $0x50] sm:$0xf]
    %v2707 = vld [vmem:[#allocation11 + $0x54] sm:$0xf]
    %v2708 = vld [vmem:[#allocation11 + $0x58] sm:$0xf]
    %v2709 = vld [vmem:[#allocation11 + $0x5c] sm:$0xf]
    %v2710 = vld [vmem:[#allocation11 + $0x60] sm:$0xf]
    %v2711 = vld [vmem:[#allocation11 + $0x64] sm:$0xf]
    %v2712 = vld [vmem:[#allocation11 + $0x68] sm:$0xf]
    %v2713 = vld [vmem:[#allocation11 + $0x6c] sm:$0xf]
    %v2714 = vld [vmem:[#allocation11 + $0x70] sm:$0xf]
    %v2715 = vld [vmem:[#allocation11 + $0x74] sm:$0xf]
    %v2716 = vld [vmem:[#allocation11 + $0x78] sm:$0xf]
    %v2717 = vld [vmem:[#allocation11 + $0x7c] sm:$0xf]
    %v2718 = vld [vmem:[#allocation11 + $0x80] sm:$0xf]
    %v2719 = vld [vmem:[#allocation11 + $0x84] sm:$0xf]
    %v2720 = vld [vmem:[#allocation11 + $0x88] sm:$0xf]
    %v2721 = vld [vmem:[#allocation11 + $0x8c] sm:$0xf]
    %v2722 = vld [vmem:[#allocation11 + $0x90] sm:$0xf]
    %v2723 = vld [vmem:[#allocation11 + $0x94] sm:$0xf]
    %v2724 = vld [vmem:[#allocation11 + $0x98] sm:$0xf]
    %v2725 = vld [vmem:[#allocation11 + $0x9c] sm:$0xf]
    %v2726 = vld [vmem:[#allocation11 + $0xa0] sm:$0xf]
    %v2727 = vld [vmem:[#allocation11 + $0xa4] sm:$0xf]
    %v2728 = vld [vmem:[#allocation11 + $0xa8] sm:$0xf]
    %v2729 = vld [vmem:[#allocation11 + $0xac] sm:$0xf]
    %v2730 = vld [vmem:[#allocation11 + $0xb0] sm:$0xf]
    %v2731 = vld [vmem:[#allocation11 + $0xb4] sm:$0xf]
    %v2732 = vld [vmem:[#allocation11 + $0xb8] sm:$0xf]
    %v2733 = vld [vmem:[#allocation11 + $0xbc] sm:$0xf]
    %v2734 = vld [vmem:[#allocation11 + $0xc0] sm:$0xf]
    %v2735 = vld [vmem:[#allocation11 + $0xc4] sm:$0xf]
    %v2736 = vld [vmem:[#allocation11 + $0xc8] sm:$0xf]
    %v2737 = vld [vmem:[#allocation11 + $0xcc] sm:$0xf]
    %v2738 = vld [vmem:[#allocation11 + $0xd0] sm:$0xf]
    %v2739 = vld [vmem:[#allocation11 + $0xd4] sm:$0xf]
    %v2740 = vld [vmem:[#allocation11 + $0xd8] sm:$0xf]
    %v2741 = vld [vmem:[#allocation11 + $0xdc] sm:$0xf]
    %v2742 = vld [vmem:[#allocation11 + $0xe0] sm:$0xf]
    %v2743 = vld [vmem:[#allocation11 + $0xe4] sm:$0xf]
    %v2744 = vld [vmem:[#allocation11 + $0xe8] sm:$0xf]
    %v2745 = vld [vmem:[#allocation11 + $0xec] sm:$0xf]
    %v2746 = vld [vmem:[#allocation11 + $0xf0] sm:$0xf]
    %v2747 = vld [vmem:[#allocation11 + $0xf4] sm:$0xf]
    %v2748 = vld [vmem:[#allocation11 + $0xf8] sm:$0xf]
    %v2749 = vld [vmem:[#allocation11 + $0xfc] sm:$0xf]
    %v2750 = vld [vmem:[%s6] sm:$0x1]
    %v2752 = vperm.slane %v2750, 0
    %v2818 = vunpack.c.l.b16 %v2686
    %v2819 = vunpack.c.l.b16 %v2687
    %v2820 = vunpack.c.l.b16 %v2688
    %v2821 = vunpack.c.l.b16 %v2689
    %v2822 = vunpack.c.l.b16 %v2690
    %v2823 = vunpack.c.l.b16 %v2691
    %v2824 = vunpack.c.l.b16 %v2692
    %v2825 = vunpack.c.l.b16 %v2693
    %v2826 = vunpack.c.l.b16 %v2694
    %v2827 = vunpack.c.l.b16 %v2695
    %v2828 = vunpack.c.l.b16 %v2696
    %v2829 = vunpack.c.l.b16 %v2697
    %v2830 = vunpack.c.l.b16 %v2698
    %v2831 = vunpack.c.l.b16 %v2699
    %v2832 = vunpack.c.l.b16 %v2700
    %v2833 = vunpack.c.l.b16 %v2701
    %v2834 = vunpack.c.l.b16 %v2702
    %v2835 = vunpack.c.l.b16 %v2703
    %v2836 = vunpack.c.l.b16 %v2704
    %v2837 = vunpack.c.l.b16 %v2705
    %v2838 = vunpack.c.l.b16 %v2706
    %v2839 = vunpack.c.l.b16 %v2707
    %v2840 = vunpack.c.l.b16 %v2708
    %v2841 = vunpack.c.l.b16 %v2709
    %v2842 = vunpack.c.l.b16 %v2710
    %v2843 = vunpack.c.l.b16 %v2711
    %v2844 = vunpack.c.l.b16 %v2712
    %v2845 = vunpack.c.l.b16 %v2713
    %v2846 = vunpack.c.l.b16 %v2714
    %v2847 = vunpack.c.l.b16 %v2715
    %v2848 = vunpack.c.l.b16 %v2716
    %v2849 = vunpack.c.l.b16 %v2717
    %v2850 = vunpack.c.l.b16 %v2718
    %v2851 = vunpack.c.l.b16 %v2719
    %v2852 = vunpack.c.l.b16 %v2720
    %v2853 = vunpack.c.l.b16 %v2721
    %v2854 = vunpack.c.l.b16 %v2722
    %v2855 = vunpack.c.l.b16 %v2723
    %v2856 = vunpack.c.l.b16 %v2724
    %v2857 = vunpack.c.l.b16 %v2725
    %v2858 = vunpack.c.l.b16 %v2726
    %v2859 = vunpack.c.l.b16 %v2727
    %v2860 = vunpack.c.l.b16 %v2728
    %v2861 = vunpack.c.l.b16 %v2729
    %v2862 = vunpack.c.l.b16 %v2730
    %v2863 = vunpack.c.l.b16 %v2731
    %v2864 = vunpack.c.l.b16 %v2732
    %v2865 = vunpack.c.l.b16 %v2733
    %v2866 = vunpack.c.l.b16 %v2734
    %v2867 = vunpack.c.l.b16 %v2735
    %v2868 = vunpack.c.l.b16 %v2736
    %v2869 = vunpack.c.l.b16 %v2737
    %v2870 = vunpack.c.l.b16 %v2738
    %v2871 = vunpack.c.l.b16 %v2739
    %v2872 = vunpack.c.l.b16 %v2740
    %v2873 = vunpack.c.l.b16 %v2741
    %v2874 = vunpack.c.l.b16 %v2742
    %v2875 = vunpack.c.l.b16 %v2743
    %v2876 = vunpack.c.l.b16 %v2744
    %v2877 = vunpack.c.l.b16 %v2745
    %v2878 = vunpack.c.l.b16 %v2746
    %v2879 = vunpack.c.l.b16 %v2747
    %v2880 = vunpack.c.l.b16 %v2748
    %v2881 = vunpack.c.l.b16 %v2749
    %v2882 = vpack.c.b16 %v2819, %v2818
    %v2883 = vpack.c.b16 %v2821, %v2820
    %v2884 = vpack.c.b16 %v2823, %v2822
    %v2885 = vpack.c.b16 %v2825, %v2824
    %v2886 = vpack.c.b16 %v2827, %v2826
    %v2887 = vpack.c.b16 %v2829, %v2828
    %v2888 = vpack.c.b16 %v2831, %v2830
    %v2889 = vpack.c.b16 %v2833, %v2832
    %v2890 = vpack.c.b16 %v2835, %v2834
    %v2891 = vpack.c.b16 %v2837, %v2836
    %v2892 = vpack.c.b16 %v2839, %v2838
    %v2893 = vpack.c.b16 %v2841, %v2840
    %v2894 = vpack.c.b16 %v2843, %v2842
    %v2895 = vpack.c.b16 %v2845, %v2844
    %v2896 = vpack.c.b16 %v2847, %v2846
    %v2897 = vpack.c.b16 %v2849, %v2848
    %v2898 = vpack.c.b16 %v2851, %v2850
    %v2899 = vpack.c.b16 %v2853, %v2852
    %v2900 = vpack.c.b16 %v2855, %v2854
    %v2901 = vpack.c.b16 %v2857, %v2856
    %v2902 = vpack.c.b16 %v2859, %v2858
    %v2903 = vpack.c.b16 %v2861, %v2860
    %v2904 = vpack.c.b16 %v2863, %v2862
    %v2905 = vpack.c.b16 %v2865, %v2864
    %v2906 = vpack.c.b16 %v2867, %v2866
    %v2907 = vpack.c.b16 %v2869, %v2868
    %v2908 = vpack.c.b16 %v2871, %v2870
    %v2909 = vpack.c.b16 %v2873, %v2872
    %v2910 = vpack.c.b16 %v2875, %v2874
    %v2911 = vpack.c.b16 %v2877, %v2876
    %v2912 = vpack.c.b16 %v2879, %v2878
    %v2913 = vpack.c.b16 %v2881, %v2880
    %2946 = vmatpush.bf16.msra.mxu0 %v2889
    %2947 = vmatpush.bf16.msra.mxu0 %v2888
    %2948 = vmatpush.bf16.msra.mxu0 %v2887
    %2949 = vmatpush.bf16.msra.mxu0 %v2886
    %2950 = vmatpush.bf16.msra.mxu0 %v2885
    %2951 = vmatpush.bf16.msra.mxu0 %v2884
    %2952 = vmatpush.bf16.msra.mxu0 %v2883
    %2953 = vmatpush.bf16.msra.mxu0 %v2882
    %2954 = vmatmul.bf16.gmra.mxu0 %v2682
    %v2955 = vpop.f32.mrf.mxu0
    %v2956 = vadd.f32 %v2752, %v2955
    %v2957 = vpop.f32.mrf.mxu0
    %2958 = vdwg.mxu0
    %2959 = vmatpush.bf16.msra.mxu0 %v2897
    %2960 = vmatpush.bf16.msra.mxu0 %v2896
    %2961 = vmatpush.bf16.msra.mxu0 %v2895
    %2962 = vmatpush.bf16.msra.mxu0 %v2894
    %2963 = vmatpush.bf16.msra.mxu0 %v2893
    %2964 = vmatpush.bf16.msra.mxu0 %v2892
    %2965 = vmatpush.bf16.msra.mxu0 %v2891
    %2966 = vmatpush.bf16.msra.mxu0 %v2890
    %2967 = vmatmul.bf16.gmra.mxu0 %v2683
    %v2968 = vpop.f32.mrf.mxu0
    %v2969 = vadd.f32 %v2956, %v2968
    %v2970 = vpop.f32.mrf.mxu0
    %2971 = vdwg.mxu0
    %2972 = vmatpush.bf16.msra.mxu0 %v2905
    %2973 = vmatpush.bf16.msra.mxu0 %v2904
    %2974 = vmatpush.bf16.msra.mxu0 %v2903
    %2975 = vmatpush.bf16.msra.mxu0 %v2902
    %2976 = vmatpush.bf16.msra.mxu0 %v2901
    %2977 = vmatpush.bf16.msra.mxu0 %v2900
    %2978 = vmatpush.bf16.msra.mxu0 %v2899
    %2979 = vmatpush.bf16.msra.mxu0 %v2898
    %2980 = vmatmul.bf16.gmra.mxu0 %v2684
    %v2981 = vpop.f32.mrf.mxu0
    %v2982 = vadd.f32 %v2969, %v2981
    %v2983 = vpop.f32.mrf.mxu0
    %2984 = vdwg.mxu0
    %2985 = vmatpush.bf16.msra.mxu0 %v2913
    %2986 = vmatpush.bf16.msra.mxu0 %v2912
    %2987 = vmatpush.bf16.msra.mxu0 %v2911
    %2988 = vmatpush.bf16.msra.mxu0 %v2910
    %2989 = vmatpush.bf16.msra.mxu0 %v2909
    %2990 = vmatpush.bf16.msra.mxu0 %v2908
    %2991 = vmatpush.bf16.msra.mxu0 %v2907
    %2992 = vmatpush.bf16.msra.mxu0 %v2906
    %2993 = vmatmul.bf16.gmra.mxu0 %v2685
    %v2994 = vpop.f32.mrf.mxu0
    %v2995 = vadd.f32 %v2982, %v2994
    %v2996 = vpop.f32.mrf.mxu0
    %2997 = vdwg.mxu0
    %2998 = vst [vmem:[#allocation13] sm:$0xff] %v2995
    // Predicated region
    $region54: #{tpu_custom_call.1} parent=1 // pred_check
      _
    $region55: #{tpu_custom_call.1} parent=1 // pred_check_branch
      %3000 = sbr.rel (0) target = $region57
    $region56: #{tpu_custom_call.1} parent=1 // pred_region
      %3002 = vsyncadd [#allocation4], 0
      %s3004 = sshll.u32 [#allocation13], 4
      %s3005 = int_to_ptr.vmem [resolvable:$true] %s3004
      %s3006 = sshll.u32 %s7, 4
      %s3007 = int_to_ptr.hbm [resolvable:$true] %s3006
      %3009 = dma.vmem_to_hbm [thread:$0]  %s3005, 128, %s3007, [#allocation4]
    $region57: #{tpu_custom_call.1} parent=1 // pred_fallthru
      _
    // Predicated region
    $region58: #{tpu_custom_call.1} parent=1 // pred_check
      _
    $region59: #{tpu_custom_call.1} parent=1 // pred_check_branch
      %3011 = sbr.rel (0) target = $region61
    $region60: #{tpu_custom_call.1} parent=1 // pred_region
      %3013 = dma.done [#allocation4], 128
    $region61: #{tpu_custom_call.1} parent=1 // pred_fallthru
      _
    %3014 = vsyncpa [#allocation3], 1
    %3015 = vsyncpa [#allocation6], 1
    %3016 = vsyncpa [#allocation9], 1
    %3017 = vsyncpa [#allocation12], 1
    %3018 = vsyncpa [#allocation4], 1

</llo_original>
